<compile_context>
chip_gen: v6e
topology: v6e:2x2x1
jax: 0.10.0
libtpu: 0.0.40
codegen_flags: <defaults>
</compile_context>

<pallas_src>
import jax
import jax.numpy as jnp
import numpy as np
from jax.experimental import pallas as pl
from jax.experimental.pallas import tpu as pltpu


def _vdp_relu_sigma_kernel(mu_lane_ref, mu_sub_ref, sigma_ref, sigma_g_ref):
    # mu_lane_ref: (nb, 1, D)   mu values for the lane (j / column) axis of the tile
    # mu_sub_ref : (nb, tr, 1)  mu values for the sublane (i / row) axis of the tile
    # sigma_ref  : (nb, tr, D)
    dt = sigma_ref.dtype
    g_lane = (mu_lane_ref[...] > 0).astype(dt)    # (nb, 1, D)
    g_sub = (mu_sub_ref[...] > 0).astype(dt)      # (nb, tr, 1)
    # Reassociated: broadcast each ReLU-gradient factor directly into sigma instead
    # of building the (tr, D) outer-product mask.
    sigma_g_ref[...] = (sigma_ref[...] * g_lane) * g_sub


def _largest_divisor(n, limit, multiple_of=1):
    best = None
    limit = max(int(limit), 1)
    for d in range(1, n + 1):
        if n % d == 0 and d % multiple_of == 0 and d <= limit:
            best = d
    return best


def _choose_tiles(N, D, itemsize, target_bytes=4 << 20):
    """Pick (nb, tr): nb batch rows per step, tr rows of the (D, D) plane per step."""
    plane_bytes = D * D * itemsize
    if plane_bytes <= target_bytes:
        tr = D
        max_nb = max(1, target_bytes // plane_bytes)
        # Keep >= 2 grid steps along the batch axis when possible (v7x: 2 TCs/chip).
        cap = max(1, min(max_nb, N if N < 2 else N // 2))
        nb = _largest_divisor(N, cap)
        return nb, tr
    # Large plane: tile rows; tr must divide D and be a multiple of 8.
    row_bytes = D * itemsize
    tr = _largest_divisor(D, max(8, target_bytes // row_bytes), multiple_of=8)
    if tr is None:
        tr = D  # fallback: full plane (rare; D has no multiple-of-8 divisor)
    return 1, tr


def vdp_relu(mu, sigma, *, target_block_bytes=4 << 20):
    """Pallas implementation of VDP_Relu.forward(mu, sigma) -> (mu_g, sigma_g)."""
    if mu.ndim == 2:
        N, D = mu.shape
        out_sigma_shape = (N, D, D)
    elif mu.ndim == 4:
        B, C, H, W = mu.shape
        N, D = B * C, H * W
        out_sigma_shape = (B, C, D, D)
    else:
        raise ValueError("mu must be 2-D (B, D) or 4-D (B, C, H, W)")

    # Mean path: trivial O(N*D) op, kept outside the Pallas kernel (perf review).
    mu_g = jnp.maximum(mu, 0)

    mu_flat = mu.reshape(N, D)
    sigma_flat = sigma.reshape(N, D, D)
    itemsize = jnp.dtype(sigma.dtype).itemsize

    nb, tr = _choose_tiles(N, D, itemsize, target_block_bytes)
    grid = (N // nb, D // tr)

    # Two views of the same mu buffer (pure metadata reshapes):
    #   lane view feeds the column mask, sublane view feeds the row mask.
    mu_lane = mu_flat.reshape(N, 1, D)
    mu_sub = mu_flat.reshape(N, D, 1)

    # VMEM budget (double-buffered in + out, with (8,128) tile padding on mu views).
    sigma_block_bytes = nb * tr * D * itemsize
    mu_lane_bytes = nb * 8 * D * itemsize
    mu_sub_bytes = nb * tr * 128 * itemsize
    vmem_needed = 2 * (2 * sigma_block_bytes + mu_lane_bytes + mu_sub_bytes)
    vmem_limit = int(min(64 << 20, vmem_needed + (8 << 20)))

    cost = pl.CostEstimate(
        flops=2 * N * D * D,
        transcendentals=0,
        bytes_accessed=(2 * N * D * D + 2 * N * D) * itemsize,
    )

    sigma_g_flat = pl.pallas_call(
        _vdp_relu_sigma_kernel,
        out_shape=jax.ShapeDtypeStruct((N, D, D), sigma.dtype),
        grid_spec=pltpu.PrefetchScalarGridSpec(
            num_scalar_prefetch=0,
            grid=grid,
            in_specs=[
                pl.BlockSpec((nb, 1, D), lambda n, r: (n, 0, 0)),
                pl.BlockSpec((nb, tr, 1), lambda n, r: (n, r, 0)),
                pl.BlockSpec((nb, tr, D), lambda n, r: (n, r, 0)),
            ],
            out_specs=pl.BlockSpec((nb, tr, D), lambda n, r: (n, r, 0)),
        ),
        compiler_params=pltpu.CompilerParams(
            dimension_semantics=("parallel", "parallel"),
            vmem_limit_bytes=vmem_limit,
        ),
        cost_estimate=cost,
    )(mu_lane, mu_sub, sigma_flat)

    return mu_g, sigma_g_flat.reshape(out_sigma_shape)


def _reference(mu, sigma):
    """Pure-JAX reference mirroring the PyTorch forward."""
    mu_g = jnp.maximum(mu, 0)
    g = (mu > 0).astype(sigma.dtype)
    if mu.ndim == 2:
        grad_square = g[:, :, None] * g[:, None, :]
        return mu_g, sigma * grad_square
    B, C, H, W = mu.shape
    gf = g.reshape(B, C, H * W)
    grad_square = gf[:, :, :, None] * gf[:, :, None, :]
    return mu_g, sigma * grad_square


if __name__ == "__main__":
    key = jax.random.PRNGKey(0)
    k1, k2, k3, k4 = jax.random.split(key, 4)

    # 4-D (convolutional) case: mu (B, C, H, W), sigma (B, C, H*W, H*W).
    B, C, H, W = 2, 4, 16, 16
    D = H * W
    mu4 = jax.random.normal(k1, (B, C, H, W), dtype=jnp.float32)
    sigma4 = jnp.abs(jax.random.normal(k2, (B, C, D, D), dtype=jnp.float32))

    mu_g4, sigma_g4 = vdp_relu(mu4, sigma4)
    jax.block_until_ready((mu_g4, sigma_g4))
    mu_g4_ref, sigma_g4_ref = _reference(mu4, sigma4)
    assert mu_g4.shape == (B, C, H, W) and sigma_g4.shape == (B, C, D, D)
    np.testing.assert_allclose(np.asarray(mu_g4), np.asarray(mu_g4_ref), rtol=1e-6, atol=1e-6)
    np.testing.assert_allclose(np.asarray(sigma_g4), np.asarray(sigma_g4_ref), rtol=1e-6, atol=1e-6)

    # 2-D (fully-connected) case: mu (B, D2), sigma (B, D2, D2).
    B2, D2 = 4, 32
    mu2 = jax.random.normal(k3, (B2, D2), dtype=jnp.float32)
    sigma2 = jnp.abs(jax.random.normal(k4, (B2, D2, D2), dtype=jnp.float32))

    mu_g2, sigma_g2 = vdp_relu(mu2, sigma2)
    jax.block_until_ready((mu_g2, sigma_g2))
    mu_g2_ref, sigma_g2_ref = _reference(mu2, sigma2)
    np.testing.assert_allclose(np.asarray(mu_g2), np.asarray(mu_g2_ref), rtol=1e-6, atol=1e-6)
    np.testing.assert_allclose(np.asarray(sigma_g2), np.asarray(sigma_g2_ref), rtol=1e-6, atol=1e-6)

    print("KERNEL_OK")
</pallas_src>

<mosaic_0001>
module attributes {stable_mosaic.version = 11 : i64} {
  func.func @_vdp_relu_sigma_kernel(%arg0: i32, %arg1: i32, %arg2: memref<4x1x256xf32, #tpu.memory_space<vmem>>, %arg3: memref<4x256x1xf32, #tpu.memory_space<vmem>>, %arg4: memref<4x256x256xf32, #tpu.memory_space<vmem>>, %arg5: memref<4x256x256xf32, #tpu.memory_space<vmem>>) attributes {dimension_semantics = [#tpu.dimension_semantics<parallel>, #tpu.dimension_semantics<parallel>], iteration_bounds = array<i64: 2, 1>, scalar_prefetch = 0 : i64, scratch_operands = 0 : i64, tpu.core_type = #tpu.core_type<tc>, window_params = [{transform_indices = @transform_0, window_bounds = array<i64: 4, 1, 256>}, {transform_indices = @transform_1, window_bounds = array<i64: 4, 256, 1>}, {transform_indices = @transform_2, window_bounds = array<i64: 4, 256, 256>}, {transform_indices = @transform_3, window_bounds = array<i64: 4, 256, 256>}]} {
    %c0 = arith.constant 0 : index
    %c0_0 = arith.constant 0 : index
    %c0_1 = arith.constant 0 : index
    %0 = vector.load %arg2[%c0, %c0_0, %c0_1] : memref<4x1x256xf32, #tpu.memory_space<vmem>>, vector<4x1x256xf32>
    %cst = arith.constant 0.000000e+00 : f32
    %1 = vector.broadcast %cst : f32 to vector<4x1x256xf32>
    %2 = arith.cmpf ogt, %0, %1 : vector<4x1x256xf32>
    %3 = arith.extui %2 : vector<4x1x256xi1> to vector<4x1x256xi32>
    %4 = arith.sitofp %3 : vector<4x1x256xi32> to vector<4x1x256xf32>
    %c0_2 = arith.constant 0 : index
    %c0_3 = arith.constant 0 : index
    %c0_4 = arith.constant 0 : index
    %5 = vector.load %arg3[%c0_2, %c0_3, %c0_4] : memref<4x256x1xf32, #tpu.memory_space<vmem>>, vector<4x256x1xf32>
    %cst_5 = arith.constant 0.000000e+00 : f32
    %6 = vector.broadcast %cst_5 : f32 to vector<4x256x1xf32>
    %7 = arith.cmpf ogt, %5, %6 : vector<4x256x1xf32>
    %8 = arith.extui %7 : vector<4x256x1xi1> to vector<4x256x1xi32>
    %9 = arith.sitofp %8 : vector<4x256x1xi32> to vector<4x256x1xf32>
    %c0_6 = arith.constant 0 : index
    %c0_7 = arith.constant 0 : index
    %c0_8 = arith.constant 0 : index
    %10 = vector.load %arg4[%c0_6, %c0_7, %c0_8] : memref<4x256x256xf32, #tpu.memory_space<vmem>>, vector<4x256x256xf32>
    %11 = vector.broadcast %4 : vector<4x1x256xf32> to vector<4x256x256xf32>
    %12 = arith.mulf %10, %11 : vector<4x256x256xf32>
    %13 = vector.broadcast %9 : vector<4x256x1xf32> to vector<4x256x256xf32>
    %14 = arith.mulf %12, %13 : vector<4x256x256xf32>
    %c0_9 = arith.constant 0 : index
    %c0_10 = arith.constant 0 : index
    %c0_11 = arith.constant 0 : index
    %15 = vector.load %arg5[%c0_9, %c0_10, %c0_11] : memref<4x256x256xf32, #tpu.memory_space<vmem>>, vector<4x256x256xf32>
    tpu.vector_store %arg5[%c0_9, %c0_10, %c0_11], %14 {strides = array<i32>} : memref<4x256x256xf32, #tpu.memory_space<vmem>>, vector<4x256x256xf32>,
    return
  }
  func.func @transform_0(%arg0: i32, %arg1: i32) -> (i32, i32, i32) {
    %c0_i32 = arith.constant 0 : i32
    %c0_i32_0 = arith.constant 0 : i32
    %c0_i32_1 = arith.constant 0 : i32
    return %arg0, %c0_i32, %c0_i32_0 : i32, i32, i32
  }
  func.func @transform_1(%arg0: i32, %arg1: i32) -> (i32, i32, i32) {
    %c0_i32 = arith.constant 0 : i32
    %c0_i32_0 = arith.constant 0 : i32
    return %arg0, %arg1, %c0_i32 : i32, i32, i32
  }
  func.func @transform_2(%arg0: i32, %arg1: i32) -> (i32, i32, i32) {
    %c0_i32 = arith.constant 0 : i32
    %c0_i32_0 = arith.constant 0 : i32
    return %arg0, %arg1, %c0_i32 : i32, i32, i32
  }
  func.func @transform_3(%arg0: i32, %arg1: i32) -> (i32, i32, i32) {
    %c0_i32 = arith.constant 0 : i32
    %c0_i32_0 = arith.constant 0 : i32
    return %arg0, %arg1, %c0_i32 : i32, i32, i32
  }
}

</mosaic_0001>

<llo_original>
// kernel: tpu_custom_call.1
$region0: #{tpu_custom_call.1}
  #allocation0 [shape = 'u32[]', space=smem, size = 0x4, offset = 0x4, fixed_abs, tag = 'smem constant byte address 0x4 - core index']
  #allocation1 [shape = 'u32[144,128]{1,0:T(1,128)}', space=vmem, size = 0x12000, scoped, tag = 'internal scratch']
  %s0 = inlined_call_operand.hbm [shape: f32[8,1,256], index: 0, kind: input, shape index: {}]
  %s1 = inlined_call_operand.vmem [shape: f32[8,256,1], index: 1, kind: input, shape index: {}]
  %s2 = inlined_call_operand.hbm [shape: f32[8,256,256], index: 2, kind: input, shape index: {}]
  %s3 = inlined_call_operand.hbm [shape: f32[8,256,256], index: 3, kind: output, shape index: {}]
  %s4 = sld [smem:[#allocation0]]
  $region53: #{tpu_custom_call.1} parent=0
    _
  %s6 = ssub.s32 1, %s4
  %s7 = scalar_select 0, %s6, %s4
  $region1: #{tpu_custom_call.1} parent=0
    #allocation2 [shape = 'u8[8192]{0}', space=vmem, size = 0x2000, scoped, tag = 'input window, operand 0']
    #allocation3 [shape = 's32[2]{0}', space=sflag, size = 0x8, scoped, tag = 'scoped memory for tpu_custom_call.1']
    #allocation4 [shape = 's32[2]{0}', space=sflag, size = 0x8, scoped, tag = 'scoped memory for tpu_custom_call.1']
    #allocation5 [shape = 'u8[2097152]{0}', space=vmem, size = 0x200000, scoped, tag = 'input window, operand 2']
    #allocation6 [shape = 's32[2]{0}', space=sflag, size = 0x8, scoped, tag = 'scoped memory for tpu_custom_call.1']
    #allocation7 [shape = 'u8[2097152]{0}', space=vmem, size = 0x200000, scoped, tag = 'output window, operand 0']
    %8 = vsyncpa [#allocation3], 0
    %s9 = scalar_lea.sflag [#allocation3], 1
    %10 = vsyncpa %s9, 0
    %11 = vsyncpa [#allocation6], 0
    %s12 = scalar_lea.sflag [#allocation6], 1
    %13 = vsyncpa %s12, 0
    %14 = vsyncpa [#allocation4], 0
    %s15 = scalar_lea.sflag [#allocation4], 1
    %16 = vsyncpa %s15, 0
    loop: start=0, step=1, limit=4
    $region2: #{tpu_custom_call.1} parent=1 // loop_pre_header
      _
    $region3: #{tpu_custom_call.1} parent=1 // loop_header
      %s18 = sphi 0, %s22
      %p19 = scmp.ge.s32.totalorder %s18, 4
      %s25 = sphi 0, %s37
      %s26 = sphi 0, %s33
      %s27 = sphi 0, %s25
      %s28 = sphi 0, %s26
      %s29 = sphi 0, %s27
      %s30 = sphi 0, %s28
      %s40 = sphi 0, %s42
      %s43 = sphi 0, %s40
      %s44 = sphi 0, %s43
      %s60 = sphi 0, %s44
      %s68 = sphi 0, %s70
      %s71 = sphi 0, %s68
      %s72 = sphi 0, %s71
      %s88 = sphi 0, %s72
      %s96 = sphi 0, %s98
      %s99 = sphi 0, %s96
      %s100 = sphi 0, %s99
      %s116 = sphi 0, %s100
      %s124 = sphi 0, %s126
      %s127 = sphi 0, %s124
      %s128 = sphi 0, %s127
      %s144 = sphi 0, %s128
    $region4: #{tpu_custom_call.1} parent=1 // loop_header_branch
      %21 = sbr.rel (%p19) target = $region8
    $region5: #{tpu_custom_call.1} parent=1 // loop_body
      %s23 = ssub.s32 %s18, 1
      %s24 = ssub.s32 %s18, 2
      %s31 = sadd.s32 1, %s26
      %p32 = scmp.ge.s32.totalorder %s31, 1
      %s33 = scalar_select %p32, 0, %s31
      %s34 = sadd.s32 1, %s25
      %s35 = scalar_select %p32, %s34, %s25
      %p36 = scmp.ge.s32.totalorder %s35, 2
      %s37 = scalar_select %p36, 0, %s35
      %s38 = ssub.s32 %s25, %s37
      %p39 = scmp.eq.s32.totalorder %s38, 0
      %s41 = sadd.s32 %s40, 1
      %s42 = scalar_select %p39, %s40, %s41
      %p45 = pneg %p39
      %p46 = scmp.eq.s32.totalorder %s18, 1
      %p47 = por %p45, %p46
      %p48 = scmp.ne.s32.totalorder %s40, %s43
      %p49 = scmp.eq.s32.totalorder %s18, 0
      %p50 = por %p48, %p49
      %p51 = scmp.ne.s32.totalorder %s40, %s43
      %p52 = scmp.eq.s32.totalorder %s23, 1
      %p53 = por %p51, %p52
      %p54 = scmp.ne.s32.totalorder %s43, %s44
      %p55 = scmp.eq.s32.totalorder %s23, 0
      %p56 = por %p54, %p55
      %p57 = scmp.ne.s32.totalorder %s43, %s44
      %p58 = scmp.eq.s32.totalorder %s24, 1
      %p59 = por %p57, %p58
      %p61 = scmp.ne.s32.totalorder %s44, %s60
      %p62 = scmp.eq.s32.totalorder %s24, 0
      %p63 = por %p61, %p62
      %s64 = ssub.s32 %s25, %s37
      %s65 = ssub.s32 %s26, %s33
      %s66 = sor.u32 %s64, %s65
      %p67 = scmp.eq.s32.totalorder %s66, 0
      %s69 = sadd.s32 %s68, 1
      %s70 = scalar_select %p67, %s68, %s69
      %p73 = pneg %p67
      %p74 = scmp.eq.s32.totalorder %s18, 1
      %p75 = por %p73, %p74
      %p76 = scmp.ne.s32.totalorder %s68, %s71
      %p77 = scmp.eq.s32.totalorder %s18, 0
      %p78 = por %p76, %p77
      %p79 = scmp.ne.s32.totalorder %s68, %s71
      %p80 = scmp.eq.s32.totalorder %s23, 1
      %p81 = por %p79, %p80
      %p82 = scmp.ne.s32.totalorder %s71, %s72
      %p83 = scmp.eq.s32.totalorder %s23, 0
      %p84 = por %p82, %p83
      %p85 = scmp.ne.s32.totalorder %s71, %s72
      %p86 = scmp.eq.s32.totalorder %s24, 1
      %p87 = por %p85, %p86
      %p89 = scmp.ne.s32.totalorder %s72, %s88
      %p90 = scmp.eq.s32.totalorder %s24, 0
      %p91 = por %p89, %p90
      %s92 = ssub.s32 %s25, %s37
      %s93 = ssub.s32 %s26, %s33
      %s94 = sor.u32 %s92, %s93
      %p95 = scmp.eq.s32.totalorder %s94, 0
      %s97 = sadd.s32 %s96, 1
      %s98 = scalar_select %p95, %s96, %s97
      %p101 = pneg %p95
      %p102 = scmp.eq.s32.totalorder %s18, 1
      %p103 = por %p101, %p102
      %p104 = scmp.ne.s32.totalorder %s96, %s99
      %p105 = scmp.eq.s32.totalorder %s18, 0
      %p106 = por %p104, %p105
      %p107 = scmp.ne.s32.totalorder %s96, %s99
      %p108 = scmp.eq.s32.totalorder %s23, 1
      %p109 = por %p107, %p108
      %p110 = scmp.ne.s32.totalorder %s99, %s100
      %p111 = scmp.eq.s32.totalorder %s23, 0
      %p112 = por %p110, %p111
      %p113 = scmp.ne.s32.totalorder %s99, %s100
      %p114 = scmp.eq.s32.totalorder %s24, 1
      %p115 = por %p113, %p114
      %p117 = scmp.ne.s32.totalorder %s100, %s116
      %p118 = scmp.eq.s32.totalorder %s24, 0
      %p119 = por %p117, %p118
      %s120 = ssub.s32 %s25, %s37
      %s121 = ssub.s32 %s26, %s33
      %s122 = sor.u32 %s120, %s121
      %p123 = scmp.eq.s32.totalorder %s122, 0
      %s125 = sadd.s32 %s124, 1
      %s126 = scalar_select %p123, %s124, %s125
      %p129 = pneg %p123
      %p130 = scmp.eq.s32.totalorder %s18, 1
      %p131 = por %p129, %p130
      %p132 = scmp.ne.s32.totalorder %s124, %s127
      %p133 = scmp.eq.s32.totalorder %s18, 0
      %p134 = por %p132, %p133
      %p135 = scmp.ne.s32.totalorder %s124, %s127
      %p136 = scmp.eq.s32.totalorder %s23, 1
      %p137 = por %p135, %p136
      %p138 = scmp.ne.s32.totalorder %s127, %s128
      %p139 = scmp.eq.s32.totalorder %s23, 0
      %p140 = por %p138, %p139
      %p141 = scmp.ne.s32.totalorder %s127, %s128
      %p142 = scmp.eq.s32.totalorder %s24, 1
      %p143 = por %p141, %p142
      %p145 = scmp.ne.s32.totalorder %s128, %s144
      %p146 = scmp.eq.s32.totalorder %s24, 0
      %p147 = por %p145, %p146
      %p148 = scmp.le.s32.totalorder 1, %s18
      %p149 = scmp.lt.s32.totalorder %s18, 3
      %p150 = pnand %p148, %p149
      %p151 = pneg %p150
      // Predicated region
      $region9: #{tpu_custom_call.1} parent=5 // pred_check
        _
      $region10: #{tpu_custom_call.1} parent=5 // pred_check_branch
        %153 = sbr.rel (%p150) target = $region12
      $region11: #{tpu_custom_call.1} parent=5 // pred_region
        %s154 = ssub.s32 %s18, 1
      $region12: #{tpu_custom_call.1} parent=5 // pred_fallthru
        _
      %p155 = scmp.lt.s32.totalorder %s18, 2
      // Predicated region
      $region13: #{tpu_custom_call.1} parent=5 // pred_check
        %p156 = pneg %p155
      $region14: #{tpu_custom_call.1} parent=5 // pred_check_branch
        %158 = sbr.rel (%p156) target = $region16
      $region15: #{tpu_custom_call.1} parent=5 // pred_region
        // Predicated region
        $region17: #{tpu_custom_call.1} parent=15 // pred_check
          %p159 = pneg %p50
        $region18: #{tpu_custom_call.1} parent=15 // pred_check_branch
          %161 = sbr.rel (%p159) target = $region20
        $region19: #{tpu_custom_call.1} parent=15 // pred_region
          %s162 = sand.u32 %s40, 1
          %s163 = scalar_lea.sflag [#allocation3], %s162
          %s164 = sand.u32 %s40, 1
          %s165 = smul.addr %s164, 8
          %s166 = scalar_lea.vmem [#allocation2], %s165
          %s167 = smul.u32 4, %s25
          %s169 = ssub.s32 128, 128
          %170 = vsyncadd %s163, %s169
          %s171 = smul.addr %s167, 2
          %s172 = smul.addr %s171, 16
          %s173 = scalar_lea.hbm %s0, %s172
          %s174 = sshll.u32 %s166, 4
          %s175 = int_to_ptr.vmem [resolvable:$true] %s174
          %180 = dma.hbm_to_vmem [thread:$0]  %s173, 128, %s175, %s163, 32, 32, 2
        $region20: #{tpu_custom_call.1} parent=15 // pred_fallthru
          _
        // Predicated region
        $region21: #{tpu_custom_call.1} parent=15 // pred_check
          %p181 = pneg %p78
        $region22: #{tpu_custom_call.1} parent=15 // pred_check_branch
          %183 = sbr.rel (%p181) target = $region24
        $region23: #{tpu_custom_call.1} parent=15 // pred_region
          %s184 = smul.u32 4, %s25
          %s185 = smul.u32 32, %s26
          %p186 = scmp.lt.s32.totalorder %s184, 7
          %s187 = scalar_select %p186, %s184, 7
          %p188 = scmp.lt.s32.totalorder %s185, 31
          %s189 = scalar_select %p188, %s185, 31
          %s190 = smul.addr %s187, 32
          %s191 = sadd.s32 %s189, %s190
          %s192 = smul.addr %s191, 8
          %s193 = scalar_lea.vmem %s1, %s192
          %s194 = smul.u32 4, %s25
          %s195 = smul.u32 32, %s26
        $region24: #{tpu_custom_call.1} parent=15 // pred_fallthru
          _
        // Predicated region
        $region25: #{tpu_custom_call.1} parent=15 // pred_check
          %p196 = pneg %p106
        $region26: #{tpu_custom_call.1} parent=15 // pred_check_branch
          %198 = sbr.rel (%p196) target = $region28
        $region27: #{tpu_custom_call.1} parent=15 // pred_region
          %s199 = sand.u32 %s96, 1
          %s200 = scalar_lea.sflag [#allocation6], %s199
          %s201 = sand.u32 %s96, 1
          %s202 = smul.addr %s201, 2048
          %s203 = scalar_lea.vmem [#allocation5], %s202
          %s204 = smul.u32 4, %s25
          %s205 = smul.u32 32, %s26
          %s207 = ssub.s32 32768, 32768
          %208 = vsyncadd %s200, %s207
          %s209 = smul.addr %s205, 2
          %s210 = smul.addr %s204, 64
          %s211 = sadd.s32 %s209, %s210
          %s212 = smul.addr %s211, 128
          %s213 = scalar_lea.hbm %s2, %s212
          %s214 = sshll.u32 %s203, 4
          %s215 = int_to_ptr.vmem [resolvable:$true] %s214
          %220 = dma.hbm_to_vmem [thread:$0]  %s213, 32768, %s215, %s200, 256, 256, 16
        $region28: #{tpu_custom_call.1} parent=15 // pred_fallthru
          _
      $region16: #{tpu_custom_call.1} parent=5 // pred_fallthru
        _
      %p221 = scmp.le.s32.totalorder 1, %s18
      %p222 = scmp.lt.s32.totalorder %s18, 3
      %p223 = pnand %p221, %p222
      %p224 = pneg %p223
      // Predicated region
      $region29: #{tpu_custom_call.1} parent=5 // pred_check
        _
      $region30: #{tpu_custom_call.1} parent=5 // pred_check_branch
        %226 = sbr.rel (%p223) target = $region32
      $region31: #{tpu_custom_call.1} parent=5 // pred_region
        %s227 = ssub.s32 %s18, 1
        %s228 = sand.u32 %s43, 1
        %s229 = scalar_lea.sflag [#allocation3], %s228
        %s230 = sand.u32 %s43, 1
        %s231 = smul.addr %s230, 8
        %s232 = scalar_lea.vmem [#allocation2], %s231
        // Predicated region
        $region33: #{tpu_custom_call.1} parent=31 // pred_check
          %p233 = pneg %p56
        $region34: #{tpu_custom_call.1} parent=31 // pred_check_branch
          %235 = sbr.rel (%p233) target = $region36
        $region35: #{tpu_custom_call.1} parent=31 // pred_region
          %236 = dma.done %s229, 128
        $region36: #{tpu_custom_call.1} parent=31 // pred_fallthru
          _
        %s237 = sand.u32 %s99, 1
        %s238 = scalar_lea.sflag [#allocation6], %s237
        %s239 = sand.u32 %s99, 1
        %s240 = smul.addr %s239, 2048
        %s241 = scalar_lea.vmem [#allocation5], %s240
        // Predicated region
        $region37: #{tpu_custom_call.1} parent=31 // pred_check
          %p242 = pneg %p112
        $region38: #{tpu_custom_call.1} parent=31 // pred_check_branch
          %244 = sbr.rel (%p242) target = $region40
        $region39: #{tpu_custom_call.1} parent=31 // pred_region
          %245 = dma.done %s238, 32768
        $region40: #{tpu_custom_call.1} parent=31 // pred_fallthru
          _
        %s246 = sand.u32 %s43, 1
        %s247 = scalar_lea.sflag [#allocation3], %s246
        %s248 = sand.u32 %s43, 1
        %s249 = smul.addr %s248, 8
        %s250 = scalar_lea.vmem [#allocation2], %s249
        %p251 = pneg %p56
        %p252 = pneg %p53
        %s253 = smul.u32 4, %s27
        %s254 = smul.u32 32, %s28
        %p255 = scmp.lt.s32.totalorder %s253, 7
        %s256 = scalar_select %p255, %s253, 7
        %p257 = scmp.lt.s32.totalorder %s254, 31
        %s258 = scalar_select %p257, %s254, 31
        %s259 = smul.addr %s256, 32
        %s260 = sadd.s32 %s258, %s259
        %s261 = smul.addr %s260, 8
        %s262 = scalar_lea.vmem %s1, %s261
        %p263 = pneg %p84
        %p264 = pneg %p81
        %s265 = sand.u32 %s99, 1
        %s266 = scalar_lea.sflag [#allocation6], %s265
        %s267 = sand.u32 %s99, 1
        %s268 = smul.addr %s267, 2048
        %s269 = scalar_lea.vmem [#allocation5], %s268
        %p270 = pneg %p112
        %p271 = pneg %p109
        %p272 = pneg %p140
        %p273 = pneg %p137
        %s274 = sand.u32 %s127, 1
        %s275 = scalar_lea.sflag [#allocation4], %s274
        %s276 = sand.u32 %s127, 1
        %s277 = smul.addr %s276, 2048
        %s278 = scalar_lea.vmem [#allocation7], %s277
        %s279 = smul.u32 4, %s27
        %s280 = smul.u32 4, %s27
        %s281 = smul.u32 32, %s28
        %p282 = scmp.lt.s32.totalorder %s280, 7
        %s283 = scalar_select %p282, %s280, 7
        %p284 = scmp.lt.s32.totalorder %s281, 31
        %s285 = scalar_select %p284, %s281, 31
        %s286 = smul.addr %s283, 32
        %s287 = sadd.s32 %s285, %s286
        %s288 = smul.addr %s287, 8
        %s289 = scalar_lea.vmem %s1, %s288
        %s290 = smul.u32 4, %s27
        %s291 = smul.u32 32, %s28
        %s292 = smul.u32 4, %s27
        %s293 = smul.u32 32, %s28
        %s294 = smul.u32 4, %s27
        %s295 = smul.u32 32, %s28
        %v296 = vld [vmem:[%s232] sm:$0x3]
        %v297 = vld [vmem:[%s232 + $0x2] sm:$0x3]
        %v298 = vld [vmem:[%s232 + $0x4] sm:$0x3]
        %v299 = vld [vmem:[%s232 + $0x6] sm:$0x3]
        %vm300 = vcmp.gt.f32.partialorder %v296, 0.0
        %vm301 = vcmp.gt.f32.partialorder %v297, 0.0
        %vm302 = vcmp.gt.f32.partialorder %v298, 0.0
        %vm303 = vcmp.gt.f32.partialorder %v299, 0.0
        %v304 = vsel %vm300, 1, 0
        %v305 = vsel %vm301, 1, 0
        %v306 = vsel %vm302, 1, 0
        %v307 = vsel %vm303, 1, 0
        %v308 = vcvt.s32.f32 %v304
        %v309 = vcvt.s32.f32 %v305
        %v310 = vcvt.s32.f32 %v306
        %v311 = vcvt.s32.f32 %v307
        %v312 = vld [vmem:[%s289] sm:$0xff]
        %v313 = vld [vmem:[%s289 + $0x8] sm:$0xff]
        %v314 = vld [vmem:[%s289 + $0x10] sm:$0xff]
        %v315 = vld [vmem:[%s289 + $0x18] sm:$0xff]
        %v316 = vld [vmem:[%s289 + $0x20] sm:$0xff]
        %v317 = vld [vmem:[%s289 + $0x28] sm:$0xff]
        %v318 = vld [vmem:[%s289 + $0x30] sm:$0xff]
        %v319 = vld [vmem:[%s289 + $0x38] sm:$0xff]
        %v320 = vld [vmem:[%s289 + $0x40] sm:$0xff]
        %v321 = vld [vmem:[%s289 + $0x48] sm:$0xff]
        %v322 = vld [vmem:[%s289 + $0x50] sm:$0xff]
        %v323 = vld [vmem:[%s289 + $0x58] sm:$0xff]
        %v324 = vld [vmem:[%s289 + $0x60] sm:$0xff]
        %v325 = vld [vmem:[%s289 + $0x68] sm:$0xff]
        %v326 = vld [vmem:[%s289 + $0x70] sm:$0xff]
        %v327 = vld [vmem:[%s289 + $0x78] sm:$0xff]
        %v328 = vld [vmem:[%s289 + $0x80] sm:$0xff]
        %v329 = vld [vmem:[%s289 + $0x88] sm:$0xff]
        %v330 = vld [vmem:[%s289 + $0x90] sm:$0xff]
        %v331 = vld [vmem:[%s289 + $0x98] sm:$0xff]
        %v332 = vld [vmem:[%s289 + $0xa0] sm:$0xff]
        %v333 = vld [vmem:[%s289 + $0xa8] sm:$0xff]
        %v334 = vld [vmem:[%s289 + $0xb0] sm:$0xff]
        %v335 = vld [vmem:[%s289 + $0xb8] sm:$0xff]
        %v336 = vld [vmem:[%s289 + $0xc0] sm:$0xff]
        %v337 = vld [vmem:[%s289 + $0xc8] sm:$0xff]
        %v338 = vld [vmem:[%s289 + $0xd0] sm:$0xff]
        %v339 = vld [vmem:[%s289 + $0xd8] sm:$0xff]
        %v340 = vld [vmem:[%s289 + $0xe0] sm:$0xff]
        %v341 = vld [vmem:[%s289 + $0xe8] sm:$0xff]
        %v342 = vld [vmem:[%s289 + $0xf0] sm:$0xff]
        %v343 = vld [vmem:[%s289 + $0xf8] sm:$0xff]
        %v344 = vld [vmem:[%s289 + $0x100] sm:$0xff]
        %v345 = vld [vmem:[%s289 + $0x108] sm:$0xff]
        %v346 = vld [vmem:[%s289 + $0x110] sm:$0xff]
        %v347 = vld [vmem:[%s289 + $0x118] sm:$0xff]
        %v348 = vld [vmem:[%s289 + $0x120] sm:$0xff]
        %v349 = vld [vmem:[%s289 + $0x128] sm:$0xff]
        %v350 = vld [vmem:[%s289 + $0x130] sm:$0xff]
        %v351 = vld [vmem:[%s289 + $0x138] sm:$0xff]
        %v352 = vld [vmem:[%s289 + $0x140] sm:$0xff]
        %v353 = vld [vmem:[%s289 + $0x148] sm:$0xff]
        %v354 = vld [vmem:[%s289 + $0x150] sm:$0xff]
        %v355 = vld [vmem:[%s289 + $0x158] sm:$0xff]
        %v356 = vld [vmem:[%s289 + $0x160] sm:$0xff]
        %v357 = vld [vmem:[%s289 + $0x168] sm:$0xff]
        %v358 = vld [vmem:[%s289 + $0x170] sm:$0xff]
        %v359 = vld [vmem:[%s289 + $0x178] sm:$0xff]
        %v360 = vld [vmem:[%s289 + $0x180] sm:$0xff]
        %v361 = vld [vmem:[%s289 + $0x188] sm:$0xff]
        %v362 = vld [vmem:[%s289 + $0x190] sm:$0xff]
        %v363 = vld [vmem:[%s289 + $0x198] sm:$0xff]
        %v364 = vld [vmem:[%s289 + $0x1a0] sm:$0xff]
        %v365 = vld [vmem:[%s289 + $0x1a8] sm:$0xff]
        %v366 = vld [vmem:[%s289 + $0x1b0] sm:$0xff]
        %v367 = vld [vmem:[%s289 + $0x1b8] sm:$0xff]
        %v368 = vld [vmem:[%s289 + $0x1c0] sm:$0xff]
        %v369 = vld [vmem:[%s289 + $0x1c8] sm:$0xff]
        %v370 = vld [vmem:[%s289 + $0x1d0] sm:$0xff]
        %v371 = vld [vmem:[%s289 + $0x1d8] sm:$0xff]
        %v372 = vld [vmem:[%s289 + $0x1e0] sm:$0xff]
        %v373 = vld [vmem:[%s289 + $0x1e8] sm:$0xff]
        %v374 = vld [vmem:[%s289 + $0x1f0] sm:$0xff]
        %v375 = vld [vmem:[%s289 + $0x1f8] sm:$0xff]
        %v376 = vld [vmem:[%s289 + $0x200] sm:$0xff]
        %v377 = vld [vmem:[%s289 + $0x208] sm:$0xff]
        %v378 = vld [vmem:[%s289 + $0x210] sm:$0xff]
        %v379 = vld [vmem:[%s289 + $0x218] sm:$0xff]
        %v380 = vld [vmem:[%s289 + $0x220] sm:$0xff]
        %v381 = vld [vmem:[%s289 + $0x228] sm:$0xff]
        %v382 = vld [vmem:[%s289 + $0x230] sm:$0xff]
        %v383 = vld [vmem:[%s289 + $0x238] sm:$0xff]
        %v384 = vld [vmem:[%s289 + $0x240] sm:$0xff]
        %v385 = vld [vmem:[%s289 + $0x248] sm:$0xff]
        %v386 = vld [vmem:[%s289 + $0x250] sm:$0xff]
        %v387 = vld [vmem:[%s289 + $0x258] sm:$0xff]
        %v388 = vld [vmem:[%s289 + $0x260] sm:$0xff]
        %v389 = vld [vmem:[%s289 + $0x268] sm:$0xff]
        %v390 = vld [vmem:[%s289 + $0x270] sm:$0xff]
        %v391 = vld [vmem:[%s289 + $0x278] sm:$0xff]
        %v392 = vld [vmem:[%s289 + $0x280] sm:$0xff]
        %v393 = vld [vmem:[%s289 + $0x288] sm:$0xff]
        %v394 = vld [vmem:[%s289 + $0x290] sm:$0xff]
        %v395 = vld [vmem:[%s289 + $0x298] sm:$0xff]
        %v396 = vld [vmem:[%s289 + $0x2a0] sm:$0xff]
        %v397 = vld [vmem:[%s289 + $0x2a8] sm:$0xff]
        %v398 = vld [vmem:[%s289 + $0x2b0] sm:$0xff]
        %v399 = vld [vmem:[%s289 + $0x2b8] sm:$0xff]
        %v400 = vld [vmem:[%s289 + $0x2c0] sm:$0xff]
        %v401 = vld [vmem:[%s289 + $0x2c8] sm:$0xff]
        %v402 = vld [vmem:[%s289 + $0x2d0] sm:$0xff]
        %v403 = vld [vmem:[%s289 + $0x2d8] sm:$0xff]
        %v404 = vld [vmem:[%s289 + $0x2e0] sm:$0xff]
        %v405 = vld [vmem:[%s289 + $0x2e8] sm:$0xff]
        %v406 = vld [vmem:[%s289 + $0x2f0] sm:$0xff]
        %v407 = vld [vmem:[%s289 + $0x2f8] sm:$0xff]
        %v408 = vld [vmem:[%s289 + $0x300] sm:$0xff]
        %v409 = vld [vmem:[%s289 + $0x308] sm:$0xff]
        %v410 = vld [vmem:[%s289 + $0x310] sm:$0xff]
        %v411 = vld [vmem:[%s289 + $0x318] sm:$0xff]
        %v412 = vld [vmem:[%s289 + $0x320] sm:$0xff]
        %v413 = vld [vmem:[%s289 + $0x328] sm:$0xff]
        %v414 = vld [vmem:[%s289 + $0x330] sm:$0xff]
        %v415 = vld [vmem:[%s289 + $0x338] sm:$0xff]
        %v416 = vld [vmem:[%s289 + $0x340] sm:$0xff]
        %v417 = vld [vmem:[%s289 + $0x348] sm:$0xff]
        %v418 = vld [vmem:[%s289 + $0x350] sm:$0xff]
        %v419 = vld [vmem:[%s289 + $0x358] sm:$0xff]
        %v420 = vld [vmem:[%s289 + $0x360] sm:$0xff]
        %v421 = vld [vmem:[%s289 + $0x368] sm:$0xff]
        %v422 = vld [vmem:[%s289 + $0x370] sm:$0xff]
        %v423 = vld [vmem:[%s289 + $0x378] sm:$0xff]
        %v424 = vld [vmem:[%s289 + $0x380] sm:$0xff]
        %v425 = vld [vmem:[%s289 + $0x388] sm:$0xff]
        %v426 = vld [vmem:[%s289 + $0x390] sm:$0xff]
        %v427 = vld [vmem:[%s289 + $0x398] sm:$0xff]
        %v428 = vld [vmem:[%s289 + $0x3a0] sm:$0xff]
        %v429 = vld [vmem:[%s289 + $0x3a8] sm:$0xff]
        %v430 = vld [vmem:[%s289 + $0x3b0] sm:$0xff]
        %v431 = vld [vmem:[%s289 + $0x3b8] sm:$0xff]
        %v432 = vld [vmem:[%s289 + $0x3c0] sm:$0xff]
        %v433 = vld [vmem:[%s289 + $0x3c8] sm:$0xff]
        %v434 = vld [vmem:[%s289 + $0x3d0] sm:$0xff]
        %v435 = vld [vmem:[%s289 + $0x3d8] sm:$0xff]
        %v436 = vld [vmem:[%s289 + $0x3e0] sm:$0xff]
        %v437 = vld [vmem:[%s289 + $0x3e8] sm:$0xff]
        %v438 = vld [vmem:[%s289 + $0x3f0] sm:$0xff]
        %v439 = vld [vmem:[%s289 + $0x3f8] sm:$0xff]
        %vm440 = vcmp.gt.f32.partialorder %v312, 0.0
        %vm441 = vcmp.gt.f32.partialorder %v313, 0.0
        %vm442 = vcmp.gt.f32.partialorder %v314, 0.0
        %vm443 = vcmp.gt.f32.partialorder %v315, 0.0
        %vm444 = vcmp.gt.f32.partialorder %v316, 0.0
        %vm445 = vcmp.gt.f32.partialorder %v317, 0.0
        %vm446 = vcmp.gt.f32.partialorder %v318, 0.0
        %vm447 = vcmp.gt.f32.partialorder %v319, 0.0
        %vm448 = vcmp.gt.f32.partialorder %v320, 0.0
        %vm449 = vcmp.gt.f32.partialorder %v321, 0.0
        %vm450 = vcmp.gt.f32.partialorder %v322, 0.0
        %vm451 = vcmp.gt.f32.partialorder %v323, 0.0
        %vm452 = vcmp.gt.f32.partialorder %v324, 0.0
        %vm453 = vcmp.gt.f32.partialorder %v325, 0.0
        %vm454 = vcmp.gt.f32.partialorder %v326, 0.0
        %vm455 = vcmp.gt.f32.partialorder %v327, 0.0
        %vm456 = vcmp.gt.f32.partialorder %v328, 0.0
        %vm457 = vcmp.gt.f32.partialorder %v329, 0.0
        %vm458 = vcmp.gt.f32.partialorder %v330, 0.0
        %vm459 = vcmp.gt.f32.partialorder %v331, 0.0
        %vm460 = vcmp.gt.f32.partialorder %v332, 0.0
        %vm461 = vcmp.gt.f32.partialorder %v333, 0.0
        %vm462 = vcmp.gt.f32.partialorder %v334, 0.0
        %vm463 = vcmp.gt.f32.partialorder %v335, 0.0
        %vm464 = vcmp.gt.f32.partialorder %v336, 0.0
        %vm465 = vcmp.gt.f32.partialorder %v337, 0.0
        %vm466 = vcmp.gt.f32.partialorder %v338, 0.0
        %vm467 = vcmp.gt.f32.partialorder %v339, 0.0
        %vm468 = vcmp.gt.f32.partialorder %v340, 0.0
        %vm469 = vcmp.gt.f32.partialorder %v341, 0.0
        %vm470 = vcmp.gt.f32.partialorder %v342, 0.0
        %vm471 = vcmp.gt.f32.partialorder %v343, 0.0
        %vm472 = vcmp.gt.f32.partialorder %v344, 0.0
        %vm473 = vcmp.gt.f32.partialorder %v345, 0.0
        %vm474 = vcmp.gt.f32.partialorder %v346, 0.0
        %vm475 = vcmp.gt.f32.partialorder %v347, 0.0
        %vm476 = vcmp.gt.f32.partialorder %v348, 0.0
        %vm477 = vcmp.gt.f32.partialorder %v349, 0.0
        %vm478 = vcmp.gt.f32.partialorder %v350, 0.0
        %vm479 = vcmp.gt.f32.partialorder %v351, 0.0
        %vm480 = vcmp.gt.f32.partialorder %v352, 0.0
        %vm481 = vcmp.gt.f32.partialorder %v353, 0.0
        %vm482 = vcmp.gt.f32.partialorder %v354, 0.0
        %vm483 = vcmp.gt.f32.partialorder %v355, 0.0
        %vm484 = vcmp.gt.f32.partialorder %v356, 0.0
        %vm485 = vcmp.gt.f32.partialorder %v357, 0.0
        %vm486 = vcmp.gt.f32.partialorder %v358, 0.0
        %vm487 = vcmp.gt.f32.partialorder %v359, 0.0
        %vm488 = vcmp.gt.f32.partialorder %v360, 0.0
        %vm489 = vcmp.gt.f32.partialorder %v361, 0.0
        %vm490 = vcmp.gt.f32.partialorder %v362, 0.0
        %vm491 = vcmp.gt.f32.partialorder %v363, 0.0
        %vm492 = vcmp.gt.f32.partialorder %v364, 0.0
        %vm493 = vcmp.gt.f32.partialorder %v365, 0.0
        %vm494 = vcmp.gt.f32.partialorder %v366, 0.0
        %vm495 = vcmp.gt.f32.partialorder %v367, 0.0
        %vm496 = vcmp.gt.f32.partialorder %v368, 0.0
        %vm497 = vcmp.gt.f32.partialorder %v369, 0.0
        %vm498 = vcmp.gt.f32.partialorder %v370, 0.0
        %vm499 = vcmp.gt.f32.partialorder %v371, 0.0
        %vm500 = vcmp.gt.f32.partialorder %v372, 0.0
        %vm501 = vcmp.gt.f32.partialorder %v373, 0.0
        %vm502 = vcmp.gt.f32.partialorder %v374, 0.0
        %vm503 = vcmp.gt.f32.partialorder %v375, 0.0
        %vm504 = vcmp.gt.f32.partialorder %v376, 0.0
        %vm505 = vcmp.gt.f32.partialorder %v377, 0.0
        %vm506 = vcmp.gt.f32.partialorder %v378, 0.0
        %vm507 = vcmp.gt.f32.partialorder %v379, 0.0
        %vm508 = vcmp.gt.f32.partialorder %v380, 0.0
        %vm509 = vcmp.gt.f32.partialorder %v381, 0.0
        %vm510 = vcmp.gt.f32.partialorder %v382, 0.0
        %vm511 = vcmp.gt.f32.partialorder %v383, 0.0
        %vm512 = vcmp.gt.f32.partialorder %v384, 0.0
        %vm513 = vcmp.gt.f32.partialorder %v385, 0.0
        %vm514 = vcmp.gt.f32.partialorder %v386, 0.0
        %vm515 = vcmp.gt.f32.partialorder %v387, 0.0
        %vm516 = vcmp.gt.f32.partialorder %v388, 0.0
        %vm517 = vcmp.gt.f32.partialorder %v389, 0.0
        %vm518 = vcmp.gt.f32.partialorder %v390, 0.0
        %vm519 = vcmp.gt.f32.partialorder %v391, 0.0
        %vm520 = vcmp.gt.f32.partialorder %v392, 0.0
        %vm521 = vcmp.gt.f32.partialorder %v393, 0.0
        %vm522 = vcmp.gt.f32.partialorder %v394, 0.0
        %vm523 = vcmp.gt.f32.partialorder %v395, 0.0
        %vm524 = vcmp.gt.f32.partialorder %v396, 0.0
        %vm525 = vcmp.gt.f32.partialorder %v397, 0.0
        %vm526 = vcmp.gt.f32.partialorder %v398, 0.0
        %vm527 = vcmp.gt.f32.partialorder %v399, 0.0
        %vm528 = vcmp.gt.f32.partialorder %v400, 0.0
        %vm529 = vcmp.gt.f32.partialorder %v401, 0.0
        %vm530 = vcmp.gt.f32.partialorder %v402, 0.0
        %vm531 = vcmp.gt.f32.partialorder %v403, 0.0
        %vm532 = vcmp.gt.f32.partialorder %v404, 0.0
        %vm533 = vcmp.gt.f32.partialorder %v405, 0.0
        %vm534 = vcmp.gt.f32.partialorder %v406, 0.0
        %vm535 = vcmp.gt.f32.partialorder %v407, 0.0
        %vm536 = vcmp.gt.f32.partialorder %v408, 0.0
        %vm537 = vcmp.gt.f32.partialorder %v409, 0.0
        %vm538 = vcmp.gt.f32.partialorder %v410, 0.0
        %vm539 = vcmp.gt.f32.partialorder %v411, 0.0
        %vm540 = vcmp.gt.f32.partialorder %v412, 0.0
        %vm541 = vcmp.gt.f32.partialorder %v413, 0.0
        %vm542 = vcmp.gt.f32.partialorder %v414, 0.0
        %vm543 = vcmp.gt.f32.partialorder %v415, 0.0
        %vm544 = vcmp.gt.f32.partialorder %v416, 0.0
        %vm545 = vcmp.gt.f32.partialorder %v417, 0.0
        %vm546 = vcmp.gt.f32.partialorder %v418, 0.0
        %vm547 = vcmp.gt.f32.partialorder %v419, 0.0
        %vm548 = vcmp.gt.f32.partialorder %v420, 0.0
        %vm549 = vcmp.gt.f32.partialorder %v421, 0.0
        %vm550 = vcmp.gt.f32.partialorder %v422, 0.0
        %vm551 = vcmp.gt.f32.partialorder %v423, 0.0
        %vm552 = vcmp.gt.f32.partialorder %v424, 0.0
        %vm553 = vcmp.gt.f32.partialorder %v425, 0.0
        %vm554 = vcmp.gt.f32.partialorder %v426, 0.0
        %vm555 = vcmp.gt.f32.partialorder %v427, 0.0
        %vm556 = vcmp.gt.f32.partialorder %v428, 0.0
        %vm557 = vcmp.gt.f32.partialorder %v429, 0.0
        %vm558 = vcmp.gt.f32.partialorder %v430, 0.0
        %vm559 = vcmp.gt.f32.partialorder %v431, 0.0
        %vm560 = vcmp.gt.f32.partialorder %v432, 0.0
        %vm561 = vcmp.gt.f32.partialorder %v433, 0.0
        %vm562 = vcmp.gt.f32.partialorder %v434, 0.0
        %vm563 = vcmp.gt.f32.partialorder %v435, 0.0
        %vm564 = vcmp.gt.f32.partialorder %v436, 0.0
        %vm565 = vcmp.gt.f32.partialorder %v437, 0.0
        %vm566 = vcmp.gt.f32.partialorder %v438, 0.0
        %vm567 = vcmp.gt.f32.partialorder %v439, 0.0
        %v568 = vsel %vm440, 1, 0
        %v569 = vsel %vm441, 1, 0
        %v570 = vsel %vm442, 1, 0
        %v571 = vsel %vm443, 1, 0
        %v572 = vsel %vm444, 1, 0
        %v573 = vsel %vm445, 1, 0
        %v574 = vsel %vm446, 1, 0
        %v575 = vsel %vm447, 1, 0
        %v576 = vsel %vm448, 1, 0
        %v577 = vsel %vm449, 1, 0
        %v578 = vsel %vm450, 1, 0
        %v579 = vsel %vm451, 1, 0
        %v580 = vsel %vm452, 1, 0
        %v581 = vsel %vm453, 1, 0
        %v582 = vsel %vm454, 1, 0
        %v583 = vsel %vm455, 1, 0
        %v584 = vsel %vm456, 1, 0
        %v585 = vsel %vm457, 1, 0
        %v586 = vsel %vm458, 1, 0
        %v587 = vsel %vm459, 1, 0
        %v588 = vsel %vm460, 1, 0
        %v589 = vsel %vm461, 1, 0
        %v590 = vsel %vm462, 1, 0
        %v591 = vsel %vm463, 1, 0
        %v592 = vsel %vm464, 1, 0
        %v593 = vsel %vm465, 1, 0
        %v594 = vsel %vm466, 1, 0
        %v595 = vsel %vm467, 1, 0
        %v596 = vsel %vm468, 1, 0
        %v597 = vsel %vm469, 1, 0
        %v598 = vsel %vm470, 1, 0
        %v599 = vsel %vm471, 1, 0
        %v600 = vsel %vm472, 1, 0
        %v601 = vsel %vm473, 1, 0
        %v602 = vsel %vm474, 1, 0
        %v603 = vsel %vm475, 1, 0
        %v604 = vsel %vm476, 1, 0
        %v605 = vsel %vm477, 1, 0
        %v606 = vsel %vm478, 1, 0
        %v607 = vsel %vm479, 1, 0
        %v608 = vsel %vm480, 1, 0
        %v609 = vsel %vm481, 1, 0
        %v610 = vsel %vm482, 1, 0
        %v611 = vsel %vm483, 1, 0
        %v612 = vsel %vm484, 1, 0
        %v613 = vsel %vm485, 1, 0
        %v614 = vsel %vm486, 1, 0
        %v615 = vsel %vm487, 1, 0
        %v616 = vsel %vm488, 1, 0
        %v617 = vsel %vm489, 1, 0
        %v618 = vsel %vm490, 1, 0
        %v619 = vsel %vm491, 1, 0
        %v620 = vsel %vm492, 1, 0
        %v621 = vsel %vm493, 1, 0
        %v622 = vsel %vm494, 1, 0
        %v623 = vsel %vm495, 1, 0
        %v624 = vsel %vm496, 1, 0
        %v625 = vsel %vm497, 1, 0
        %v626 = vsel %vm498, 1, 0
        %v627 = vsel %vm499, 1, 0
        %v628 = vsel %vm500, 1, 0
        %v629 = vsel %vm501, 1, 0
        %v630 = vsel %vm502, 1, 0
        %v631 = vsel %vm503, 1, 0
        %v632 = vsel %vm504, 1, 0
        %v633 = vsel %vm505, 1, 0
        %v634 = vsel %vm506, 1, 0
        %v635 = vsel %vm507, 1, 0
        %v636 = vsel %vm508, 1, 0
        %v637 = vsel %vm509, 1, 0
        %v638 = vsel %vm510, 1, 0
        %v639 = vsel %vm511, 1, 0
        %v640 = vsel %vm512, 1, 0
        %v641 = vsel %vm513, 1, 0
        %v642 = vsel %vm514, 1, 0
        %v643 = vsel %vm515, 1, 0
        %v644 = vsel %vm516, 1, 0
        %v645 = vsel %vm517, 1, 0
        %v646 = vsel %vm518, 1, 0
        %v647 = vsel %vm519, 1, 0
        %v648 = vsel %vm520, 1, 0
        %v649 = vsel %vm521, 1, 0
        %v650 = vsel %vm522, 1, 0
        %v651 = vsel %vm523, 1, 0
        %v652 = vsel %vm524, 1, 0
        %v653 = vsel %vm525, 1, 0
        %v654 = vsel %vm526, 1, 0
        %v655 = vsel %vm527, 1, 0
        %v656 = vsel %vm528, 1, 0
        %v657 = vsel %vm529, 1, 0
        %v658 = vsel %vm530, 1, 0
        %v659 = vsel %vm531, 1, 0
        %v660 = vsel %vm532, 1, 0
        %v661 = vsel %vm533, 1, 0
        %v662 = vsel %vm534, 1, 0
        %v663 = vsel %vm535, 1, 0
        %v664 = vsel %vm536, 1, 0
        %v665 = vsel %vm537, 1, 0
        %v666 = vsel %vm538, 1, 0
        %v667 = vsel %vm539, 1, 0
        %v668 = vsel %vm540, 1, 0
        %v669 = vsel %vm541, 1, 0
        %v670 = vsel %vm542, 1, 0
        %v671 = vsel %vm543, 1, 0
        %v672 = vsel %vm544, 1, 0
        %v673 = vsel %vm545, 1, 0
        %v674 = vsel %vm546, 1, 0
        %v675 = vsel %vm547, 1, 0
        %v676 = vsel %vm548, 1, 0
        %v677 = vsel %vm549, 1, 0
        %v678 = vsel %vm550, 1, 0
        %v679 = vsel %vm551, 1, 0
        %v680 = vsel %vm552, 1, 0
        %v681 = vsel %vm553, 1, 0
        %v682 = vsel %vm554, 1, 0
        %v683 = vsel %vm555, 1, 0
        %v684 = vsel %vm556, 1, 0
        %v685 = vsel %vm557, 1, 0
        %v686 = vsel %vm558, 1, 0
        %v687 = vsel %vm559, 1, 0
        %v688 = vsel %vm560, 1, 0
        %v689 = vsel %vm561, 1, 0
        %v690 = vsel %vm562, 1, 0
        %v691 = vsel %vm563, 1, 0
        %v692 = vsel %vm564, 1, 0
        %v693 = vsel %vm565, 1, 0
        %v694 = vsel %vm566, 1, 0
        %v695 = vsel %vm567, 1, 0
        %v696 = vcvt.s32.f32 %v568
        %v697 = vcvt.s32.f32 %v569
        %v698 = vcvt.s32.f32 %v570
        %v699 = vcvt.s32.f32 %v571
        %v700 = vcvt.s32.f32 %v572
        %v701 = vcvt.s32.f32 %v573
        %v702 = vcvt.s32.f32 %v574
        %v703 = vcvt.s32.f32 %v575
        %v704 = vcvt.s32.f32 %v576
        %v705 = vcvt.s32.f32 %v577
        %v706 = vcvt.s32.f32 %v578
        %v707 = vcvt.s32.f32 %v579
        %v708 = vcvt.s32.f32 %v580
        %v709 = vcvt.s32.f32 %v581
        %v710 = vcvt.s32.f32 %v582
        %v711 = vcvt.s32.f32 %v583
        %v712 = vcvt.s32.f32 %v584
        %v713 = vcvt.s32.f32 %v585
        %v714 = vcvt.s32.f32 %v586
        %v715 = vcvt.s32.f32 %v587
        %v716 = vcvt.s32.f32 %v588
        %v717 = vcvt.s32.f32 %v589
        %v718 = vcvt.s32.f32 %v590
        %v719 = vcvt.s32.f32 %v591
        %v720 = vcvt.s32.f32 %v592
        %v721 = vcvt.s32.f32 %v593
        %v722 = vcvt.s32.f32 %v594
        %v723 = vcvt.s32.f32 %v595
        %v724 = vcvt.s32.f32 %v596
        %v725 = vcvt.s32.f32 %v597
        %v726 = vcvt.s32.f32 %v598
        %v727 = vcvt.s32.f32 %v599
        %v728 = vcvt.s32.f32 %v600
        %v729 = vcvt.s32.f32 %v601
        %v730 = vcvt.s32.f32 %v602
        %v731 = vcvt.s32.f32 %v603
        %v732 = vcvt.s32.f32 %v604
        %v733 = vcvt.s32.f32 %v605
        %v734 = vcvt.s32.f32 %v606
        %v735 = vcvt.s32.f32 %v607
        %v736 = vcvt.s32.f32 %v608
        %v737 = vcvt.s32.f32 %v609
        %v738 = vcvt.s32.f32 %v610
        %v739 = vcvt.s32.f32 %v611
        %v740 = vcvt.s32.f32 %v612
        %v741 = vcvt.s32.f32 %v613
        %v742 = vcvt.s32.f32 %v614
        %v743 = vcvt.s32.f32 %v615
        %v744 = vcvt.s32.f32 %v616
        %v745 = vcvt.s32.f32 %v617
        %v746 = vcvt.s32.f32 %v618
        %v747 = vcvt.s32.f32 %v619
        %v748 = vcvt.s32.f32 %v620
        %v749 = vcvt.s32.f32 %v621
        %v750 = vcvt.s32.f32 %v622
        %v751 = vcvt.s32.f32 %v623
        %v752 = vcvt.s32.f32 %v624
        %v753 = vcvt.s32.f32 %v625
        %v754 = vcvt.s32.f32 %v626
        %v755 = vcvt.s32.f32 %v627
        %v756 = vcvt.s32.f32 %v628
        %v757 = vcvt.s32.f32 %v629
        %v758 = vcvt.s32.f32 %v630
        %v759 = vcvt.s32.f32 %v631
        %v760 = vcvt.s32.f32 %v632
        %v761 = vcvt.s32.f32 %v633
        %v762 = vcvt.s32.f32 %v634
        %v763 = vcvt.s32.f32 %v635
        %v764 = vcvt.s32.f32 %v636
        %v765 = vcvt.s32.f32 %v637
        %v766 = vcvt.s32.f32 %v638
        %v767 = vcvt.s32.f32 %v639
        %v768 = vcvt.s32.f32 %v640
        %v769 = vcvt.s32.f32 %v641
        %v770 = vcvt.s32.f32 %v642
        %v771 = vcvt.s32.f32 %v643
        %v772 = vcvt.s32.f32 %v644
        %v773 = vcvt.s32.f32 %v645
        %v774 = vcvt.s32.f32 %v646
        %v775 = vcvt.s32.f32 %v647
        %v776 = vcvt.s32.f32 %v648
        %v777 = vcvt.s32.f32 %v649
        %v778 = vcvt.s32.f32 %v650
        %v779 = vcvt.s32.f32 %v651
        %v780 = vcvt.s32.f32 %v652
        %v781 = vcvt.s32.f32 %v653
        %v782 = vcvt.s32.f32 %v654
        %v783 = vcvt.s32.f32 %v655
        %v784 = vcvt.s32.f32 %v656
        %v785 = vcvt.s32.f32 %v657
        %v786 = vcvt.s32.f32 %v658
        %v787 = vcvt.s32.f32 %v659
        %v788 = vcvt.s32.f32 %v660
        %v789 = vcvt.s32.f32 %v661
        %v790 = vcvt.s32.f32 %v662
        %v791 = vcvt.s32.f32 %v663
        %v792 = vcvt.s32.f32 %v664
        %v793 = vcvt.s32.f32 %v665
        %v794 = vcvt.s32.f32 %v666
        %v795 = vcvt.s32.f32 %v667
        %v796 = vcvt.s32.f32 %v668
        %v797 = vcvt.s32.f32 %v669
        %v798 = vcvt.s32.f32 %v670
        %v799 = vcvt.s32.f32 %v671
        %v800 = vcvt.s32.f32 %v672
        %v801 = vcvt.s32.f32 %v673
        %v802 = vcvt.s32.f32 %v674
        %v803 = vcvt.s32.f32 %v675
        %v804 = vcvt.s32.f32 %v676
        %v805 = vcvt.s32.f32 %v677
        %v806 = vcvt.s32.f32 %v678
        %v807 = vcvt.s32.f32 %v679
        %v808 = vcvt.s32.f32 %v680
        %v809 = vcvt.s32.f32 %v681
        %v810 = vcvt.s32.f32 %v682
        %v811 = vcvt.s32.f32 %v683
        %v812 = vcvt.s32.f32 %v684
        %v813 = vcvt.s32.f32 %v685
        %v814 = vcvt.s32.f32 %v686
        %v815 = vcvt.s32.f32 %v687
        %v816 = vcvt.s32.f32 %v688
        %v817 = vcvt.s32.f32 %v689
        %v818 = vcvt.s32.f32 %v690
        %v819 = vcvt.s32.f32 %v691
        %v820 = vcvt.s32.f32 %v692
        %v821 = vcvt.s32.f32 %v693
        %v822 = vcvt.s32.f32 %v694
        %v823 = vcvt.s32.f32 %v695
        %v824 = vld [vmem:[%s241] sm:$0xff]
        %v825 = vld [vmem:[%s241 + $0x8] sm:$0xff]
        %v826 = vld [vmem:[%s241 + $0x10] sm:$0xff]
        %v827 = vld [vmem:[%s241 + $0x18] sm:$0xff]
        %v828 = vld [vmem:[%s241 + $0x20] sm:$0xff]
        %v829 = vld [vmem:[%s241 + $0x28] sm:$0xff]
        %v830 = vld [vmem:[%s241 + $0x30] sm:$0xff]
        %v831 = vld [vmem:[%s241 + $0x38] sm:$0xff]
        %v832 = vld [vmem:[%s241 + $0x40] sm:$0xff]
        %v833 = vld [vmem:[%s241 + $0x48] sm:$0xff]
        %v834 = vld [vmem:[%s241 + $0x50] sm:$0xff]
        %v835 = vld [vmem:[%s241 + $0x58] sm:$0xff]
        %v836 = vld [vmem:[%s241 + $0x60] sm:$0xff]
        %v837 = vld [vmem:[%s241 + $0x68] sm:$0xff]
        %v838 = vld [vmem:[%s241 + $0x70] sm:$0xff]
        %v839 = vld [vmem:[%s241 + $0x78] sm:$0xff]
        %v840 = vld [vmem:[%s241 + $0x80] sm:$0xff]
        %v841 = vld [vmem:[%s241 + $0x88] sm:$0xff]
        %v842 = vld [vmem:[%s241 + $0x90] sm:$0xff]
        %v843 = vld [vmem:[%s241 + $0x98] sm:$0xff]
        %v844 = vld [vmem:[%s241 + $0xa0] sm:$0xff]
        %v845 = vld [vmem:[%s241 + $0xa8] sm:$0xff]
        %v846 = vld [vmem:[%s241 + $0xb0] sm:$0xff]
        %v847 = vld [vmem:[%s241 + $0xb8] sm:$0xff]
        %v848 = vld [vmem:[%s241 + $0xc0] sm:$0xff]
        %v849 = vld [vmem:[%s241 + $0xc8] sm:$0xff]
        %v850 = vld [vmem:[%s241 + $0xd0] sm:$0xff]
        %v851 = vld [vmem:[%s241 + $0xd8] sm:$0xff]
        %v852 = vld [vmem:[%s241 + $0xe0] sm:$0xff]
        %v853 = vld [vmem:[%s241 + $0xe8] sm:$0xff]
        %v854 = vld [vmem:[%s241 + $0xf0] sm:$0xff]
        %v855 = vld [vmem:[%s241 + $0xf8] sm:$0xff]
        %v856 = vld [vmem:[%s241 + $0x100] sm:$0xff]
        %v857 = vld [vmem:[%s241 + $0x108] sm:$0xff]
        %v858 = vld [vmem:[%s241 + $0x110] sm:$0xff]
        %v859 = vld [vmem:[%s241 + $0x118] sm:$0xff]
        %v860 = vld [vmem:[%s241 + $0x120] sm:$0xff]
        %v861 = vld [vmem:[%s241 + $0x128] sm:$0xff]
        %v862 = vld [vmem:[%s241 + $0x130] sm:$0xff]
        %v863 = vld [vmem:[%s241 + $0x138] sm:$0xff]
        %v864 = vld [vmem:[%s241 + $0x140] sm:$0xff]
        %v865 = vld [vmem:[%s241 + $0x148] sm:$0xff]
        %v866 = vld [vmem:[%s241 + $0x150] sm:$0xff]
        %v867 = vld [vmem:[%s241 + $0x158] sm:$0xff]
        %v868 = vld [vmem:[%s241 + $0x160] sm:$0xff]
        %v869 = vld [vmem:[%s241 + $0x168] sm:$0xff]
        %v870 = vld [vmem:[%s241 + $0x170] sm:$0xff]
        %v871 = vld [vmem:[%s241 + $0x178] sm:$0xff]
        %v872 = vld [vmem:[%s241 + $0x180] sm:$0xff]
        %v873 = vld [vmem:[%s241 + $0x188] sm:$0xff]
        %v874 = vld [vmem:[%s241 + $0x190] sm:$0xff]
        %v875 = vld [vmem:[%s241 + $0x198] sm:$0xff]
        %v876 = vld [vmem:[%s241 + $0x1a0] sm:$0xff]
        %v877 = vld [vmem:[%s241 + $0x1a8] sm:$0xff]
        %v878 = vld [vmem:[%s241 + $0x1b0] sm:$0xff]
        %v879 = vld [vmem:[%s241 + $0x1b8] sm:$0xff]
        %v880 = vld [vmem:[%s241 + $0x1c0] sm:$0xff]
        %v881 = vld [vmem:[%s241 + $0x1c8] sm:$0xff]
        %v882 = vld [vmem:[%s241 + $0x1d0] sm:$0xff]
        %v883 = vld [vmem:[%s241 + $0x1d8] sm:$0xff]
        %v884 = vld [vmem:[%s241 + $0x1e0] sm:$0xff]
        %v885 = vld [vmem:[%s241 + $0x1e8] sm:$0xff]
        %v886 = vld [vmem:[%s241 + $0x1f0] sm:$0xff]
        %v887 = vld [vmem:[%s241 + $0x1f8] sm:$0xff]
        %v888 = vld [vmem:[%s241 + $0x200] sm:$0xff]
        %v889 = vld [vmem:[%s241 + $0x208] sm:$0xff]
        %v890 = vld [vmem:[%s241 + $0x210] sm:$0xff]
        %v891 = vld [vmem:[%s241 + $0x218] sm:$0xff]
        %v892 = vld [vmem:[%s241 + $0x220] sm:$0xff]
        %v893 = vld [vmem:[%s241 + $0x228] sm:$0xff]
        %v894 = vld [vmem:[%s241 + $0x230] sm:$0xff]
        %v895 = vld [vmem:[%s241 + $0x238] sm:$0xff]
        %v896 = vld [vmem:[%s241 + $0x240] sm:$0xff]
        %v897 = vld [vmem:[%s241 + $0x248] sm:$0xff]
        %v898 = vld [vmem:[%s241 + $0x250] sm:$0xff]
        %v899 = vld [vmem:[%s241 + $0x258] sm:$0xff]
        %v900 = vld [vmem:[%s241 + $0x260] sm:$0xff]
        %v901 = vld [vmem:[%s241 + $0x268] sm:$0xff]
        %v902 = vld [vmem:[%s241 + $0x270] sm:$0xff]
        %v903 = vld [vmem:[%s241 + $0x278] sm:$0xff]
        %v904 = vld [vmem:[%s241 + $0x280] sm:$0xff]
        %v905 = vld [vmem:[%s241 + $0x288] sm:$0xff]
        %v906 = vld [vmem:[%s241 + $0x290] sm:$0xff]
        %v907 = vld [vmem:[%s241 + $0x298] sm:$0xff]
        %v908 = vld [vmem:[%s241 + $0x2a0] sm:$0xff]
        %v909 = vld [vmem:[%s241 + $0x2a8] sm:$0xff]
        %v910 = vld [vmem:[%s241 + $0x2b0] sm:$0xff]
        %v911 = vld [vmem:[%s241 + $0x2b8] sm:$0xff]
        %v912 = vld [vmem:[%s241 + $0x2c0] sm:$0xff]
        %v913 = vld [vmem:[%s241 + $0x2c8] sm:$0xff]
        %v914 = vld [vmem:[%s241 + $0x2d0] sm:$0xff]
        %v915 = vld [vmem:[%s241 + $0x2d8] sm:$0xff]
        %v916 = vld [vmem:[%s241 + $0x2e0] sm:$0xff]
        %v917 = vld [vmem:[%s241 + $0x2e8] sm:$0xff]
        %v918 = vld [vmem:[%s241 + $0x2f0] sm:$0xff]
        %v919 = vld [vmem:[%s241 + $0x2f8] sm:$0xff]
        %v920 = vld [vmem:[%s241 + $0x300] sm:$0xff]
        %v921 = vld [vmem:[%s241 + $0x308] sm:$0xff]
        %v922 = vld [vmem:[%s241 + $0x310] sm:$0xff]
        %v923 = vld [vmem:[%s241 + $0x318] sm:$0xff]
        %v924 = vld [vmem:[%s241 + $0x320] sm:$0xff]
        %v925 = vld [vmem:[%s241 + $0x328] sm:$0xff]
        %v926 = vld [vmem:[%s241 + $0x330] sm:$0xff]
        %v927 = vld [vmem:[%s241 + $0x338] sm:$0xff]
        %v928 = vld [vmem:[%s241 + $0x340] sm:$0xff]
        %v929 = vld [vmem:[%s241 + $0x348] sm:$0xff]
        %v930 = vld [vmem:[%s241 + $0x350] sm:$0xff]
        %v931 = vld [vmem:[%s241 + $0x358] sm:$0xff]
        %v932 = vld [vmem:[%s241 + $0x360] sm:$0xff]
        %v933 = vld [vmem:[%s241 + $0x368] sm:$0xff]
        %v934 = vld [vmem:[%s241 + $0x370] sm:$0xff]
        %v935 = vld [vmem:[%s241 + $0x378] sm:$0xff]
        %v936 = vld [vmem:[%s241 + $0x380] sm:$0xff]
        %v937 = vld [vmem:[%s241 + $0x388] sm:$0xff]
        %v938 = vld [vmem:[%s241 + $0x390] sm:$0xff]
        %v939 = vld [vmem:[%s241 + $0x398] sm:$0xff]
        %v940 = vld [vmem:[%s241 + $0x3a0] sm:$0xff]
        %v941 = vld [vmem:[%s241 + $0x3a8] sm:$0xff]
        %v942 = vld [vmem:[%s241 + $0x3b0] sm:$0xff]
        %v943 = vld [vmem:[%s241 + $0x3b8] sm:$0xff]
        %v944 = vld [vmem:[%s241 + $0x3c0] sm:$0xff]
        %v945 = vld [vmem:[%s241 + $0x3c8] sm:$0xff]
        %v946 = vld [vmem:[%s241 + $0x3d0] sm:$0xff]
        %v947 = vld [vmem:[%s241 + $0x3d8] sm:$0xff]
        %v948 = vld [vmem:[%s241 + $0x3e0] sm:$0xff]
        %v949 = vld [vmem:[%s241 + $0x3e8] sm:$0xff]
        %v950 = vld [vmem:[%s241 + $0x3f0] sm:$0xff]
        %v951 = vld [vmem:[%s241 + $0x3f8] sm:$0xff]
        %v952 = vld [vmem:[%s241 + $0x400] sm:$0xff]
        %v953 = vld [vmem:[%s241 + $0x408] sm:$0xff]
        %v954 = vld [vmem:[%s241 + $0x410] sm:$0xff]
        %v955 = vld [vmem:[%s241 + $0x418] sm:$0xff]
        %v956 = vld [vmem:[%s241 + $0x420] sm:$0xff]
        %v957 = vld [vmem:[%s241 + $0x428] sm:$0xff]
        %v958 = vld [vmem:[%s241 + $0x430] sm:$0xff]
        %v959 = vld [vmem:[%s241 + $0x438] sm:$0xff]
        %v960 = vld [vmem:[%s241 + $0x440] sm:$0xff]
        %v961 = vld [vmem:[%s241 + $0x448] sm:$0xff]
        %v962 = vld [vmem:[%s241 + $0x450] sm:$0xff]
        %v963 = vld [vmem:[%s241 + $0x458] sm:$0xff]
        %v964 = vld [vmem:[%s241 + $0x460] sm:$0xff]
        %v965 = vld [vmem:[%s241 + $0x468] sm:$0xff]
        %v966 = vld [vmem:[%s241 + $0x470] sm:$0xff]
        %v967 = vld [vmem:[%s241 + $0x478] sm:$0xff]
        %v968 = vld [vmem:[%s241 + $0x480] sm:$0xff]
        %v969 = vld [vmem:[%s241 + $0x488] sm:$0xff]
        %v970 = vld [vmem:[%s241 + $0x490] sm:$0xff]
        %v971 = vld [vmem:[%s241 + $0x498] sm:$0xff]
        %v972 = vld [vmem:[%s241 + $0x4a0] sm:$0xff]
        %v973 = vld [vmem:[%s241 + $0x4a8] sm:$0xff]
        %v974 = vld [vmem:[%s241 + $0x4b0] sm:$0xff]
        %v975 = vld [vmem:[%s241 + $0x4b8] sm:$0xff]
        %v976 = vld [vmem:[%s241 + $0x4c0] sm:$0xff]
        %v977 = vld [vmem:[%s241 + $0x4c8] sm:$0xff]
        %v978 = vld [vmem:[%s241 + $0x4d0] sm:$0xff]
        %v979 = vld [vmem:[%s241 + $0x4d8] sm:$0xff]
        %v980 = vld [vmem:[%s241 + $0x4e0] sm:$0xff]
        %v981 = vld [vmem:[%s241 + $0x4e8] sm:$0xff]
        %v982 = vld [vmem:[%s241 + $0x4f0] sm:$0xff]
        %v983 = vld [vmem:[%s241 + $0x4f8] sm:$0xff]
        %v984 = vld [vmem:[%s241 + $0x500] sm:$0xff]
        %v985 = vld [vmem:[%s241 + $0x508] sm:$0xff]
        %v986 = vld [vmem:[%s241 + $0x510] sm:$0xff]
        %v987 = vld [vmem:[%s241 + $0x518] sm:$0xff]
        %v988 = vld [vmem:[%s241 + $0x520] sm:$0xff]
        %v989 = vld [vmem:[%s241 + $0x528] sm:$0xff]
        %v990 = vld [vmem:[%s241 + $0x530] sm:$0xff]
        %v991 = vld [vmem:[%s241 + $0x538] sm:$0xff]
        %v992 = vld [vmem:[%s241 + $0x540] sm:$0xff]
        %v993 = vld [vmem:[%s241 + $0x548] sm:$0xff]
        %v994 = vld [vmem:[%s241 + $0x550] sm:$0xff]
        %v995 = vld [vmem:[%s241 + $0x558] sm:$0xff]
        %v996 = vld [vmem:[%s241 + $0x560] sm:$0xff]
        %v997 = vld [vmem:[%s241 + $0x568] sm:$0xff]
        %v998 = vld [vmem:[%s241 + $0x570] sm:$0xff]
        %v999 = vld [vmem:[%s241 + $0x578] sm:$0xff]
        %v1000 = vld [vmem:[%s241 + $0x580] sm:$0xff]
        %v1001 = vld [vmem:[%s241 + $0x588] sm:$0xff]
        %v1002 = vld [vmem:[%s241 + $0x590] sm:$0xff]
        %v1003 = vld [vmem:[%s241 + $0x598] sm:$0xff]
        %v1004 = vld [vmem:[%s241 + $0x5a0] sm:$0xff]
        %v1005 = vld [vmem:[%s241 + $0x5a8] sm:$0xff]
        %v1006 = vld [vmem:[%s241 + $0x5b0] sm:$0xff]
        %v1007 = vld [vmem:[%s241 + $0x5b8] sm:$0xff]
        %v1008 = vld [vmem:[%s241 + $0x5c0] sm:$0xff]
        %v1009 = vld [vmem:[%s241 + $0x5c8] sm:$0xff]
        %v1010 = vld [vmem:[%s241 + $0x5d0] sm:$0xff]
        %v1011 = vld [vmem:[%s241 + $0x5d8] sm:$0xff]
        %v1012 = vld [vmem:[%s241 + $0x5e0] sm:$0xff]
        %v1013 = vld [vmem:[%s241 + $0x5e8] sm:$0xff]
        %v1014 = vld [vmem:[%s241 + $0x5f0] sm:$0xff]
        %v1015 = vld [vmem:[%s241 + $0x5f8] sm:$0xff]
        %v1016 = vld [vmem:[%s241 + $0x600] sm:$0xff]
        %v1017 = vld [vmem:[%s241 + $0x608] sm:$0xff]
        %v1018 = vld [vmem:[%s241 + $0x610] sm:$0xff]
        %v1019 = vld [vmem:[%s241 + $0x618] sm:$0xff]
        %v1020 = vld [vmem:[%s241 + $0x620] sm:$0xff]
        %v1021 = vld [vmem:[%s241 + $0x628] sm:$0xff]
        %v1022 = vld [vmem:[%s241 + $0x630] sm:$0xff]
        %v1023 = vld [vmem:[%s241 + $0x638] sm:$0xff]
        %v1024 = vld [vmem:[%s241 + $0x640] sm:$0xff]
        %v1025 = vld [vmem:[%s241 + $0x648] sm:$0xff]
        %v1026 = vld [vmem:[%s241 + $0x650] sm:$0xff]
        %v1027 = vld [vmem:[%s241 + $0x658] sm:$0xff]
        %v1028 = vld [vmem:[%s241 + $0x660] sm:$0xff]
        %v1029 = vld [vmem:[%s241 + $0x668] sm:$0xff]
        %v1030 = vld [vmem:[%s241 + $0x670] sm:$0xff]
        %v1031 = vld [vmem:[%s241 + $0x678] sm:$0xff]
        %v1032 = vld [vmem:[%s241 + $0x680] sm:$0xff]
        %v1033 = vld [vmem:[%s241 + $0x688] sm:$0xff]
        %v1034 = vld [vmem:[%s241 + $0x690] sm:$0xff]
        %v1035 = vld [vmem:[%s241 + $0x698] sm:$0xff]
        %v1036 = vld [vmem:[%s241 + $0x6a0] sm:$0xff]
        %v1037 = vld [vmem:[%s241 + $0x6a8] sm:$0xff]
        %v1038 = vld [vmem:[%s241 + $0x6b0] sm:$0xff]
        %v1039 = vld [vmem:[%s241 + $0x6b8] sm:$0xff]
        %v1040 = vld [vmem:[%s241 + $0x6c0] sm:$0xff]
        %v1041 = vld [vmem:[%s241 + $0x6c8] sm:$0xff]
        %v1042 = vld [vmem:[%s241 + $0x6d0] sm:$0xff]
        %v1043 = vld [vmem:[%s241 + $0x6d8] sm:$0xff]
        %v1044 = vld [vmem:[%s241 + $0x6e0] sm:$0xff]
        %v1045 = vld [vmem:[%s241 + $0x6e8] sm:$0xff]
        %v1046 = vld [vmem:[%s241 + $0x6f0] sm:$0xff]
        %v1047 = vld [vmem:[%s241 + $0x6f8] sm:$0xff]
        %v1048 = vld [vmem:[%s241 + $0x700] sm:$0xff]
        %v1049 = vld [vmem:[%s241 + $0x708] sm:$0xff]
        %v1050 = vld [vmem:[%s241 + $0x710] sm:$0xff]
        %v1051 = vld [vmem:[%s241 + $0x718] sm:$0xff]
        %v1052 = vld [vmem:[%s241 + $0x720] sm:$0xff]
        %v1053 = vld [vmem:[%s241 + $0x728] sm:$0xff]
        %v1054 = vld [vmem:[%s241 + $0x730] sm:$0xff]
        %v1055 = vld [vmem:[%s241 + $0x738] sm:$0xff]
        %v1056 = vld [vmem:[%s241 + $0x740] sm:$0xff]
        %v1057 = vld [vmem:[%s241 + $0x748] sm:$0xff]
        %v1058 = vld [vmem:[%s241 + $0x750] sm:$0xff]
        %v1059 = vld [vmem:[%s241 + $0x758] sm:$0xff]
        %v1060 = vld [vmem:[%s241 + $0x760] sm:$0xff]
        %v1061 = vld [vmem:[%s241 + $0x768] sm:$0xff]
        %v1062 = vld [vmem:[%s241 + $0x770] sm:$0xff]
        %v1063 = vld [vmem:[%s241 + $0x778] sm:$0xff]
        %v1064 = vld [vmem:[%s241 + $0x780] sm:$0xff]
        %v1065 = vld [vmem:[%s241 + $0x788] sm:$0xff]
        %v1066 = vld [vmem:[%s241 + $0x790] sm:$0xff]
        %v1067 = vld [vmem:[%s241 + $0x798] sm:$0xff]
        %v1068 = vld [vmem:[%s241 + $0x7a0] sm:$0xff]
        %v1069 = vld [vmem:[%s241 + $0x7a8] sm:$0xff]
        %v1070 = vld [vmem:[%s241 + $0x7b0] sm:$0xff]
        %v1071 = vld [vmem:[%s241 + $0x7b8] sm:$0xff]
        %v1072 = vld [vmem:[%s241 + $0x7c0] sm:$0xff]
        %v1073 = vld [vmem:[%s241 + $0x7c8] sm:$0xff]
        %v1074 = vld [vmem:[%s241 + $0x7d0] sm:$0xff]
        %v1075 = vld [vmem:[%s241 + $0x7d8] sm:$0xff]
        %v1076 = vld [vmem:[%s241 + $0x7e0] sm:$0xff]
        %v1077 = vld [vmem:[%s241 + $0x7e8] sm:$0xff]
        %v1078 = vld [vmem:[%s241 + $0x7f0] sm:$0xff]
        %v1079 = vld [vmem:[%s241 + $0x7f8] sm:$0xff]
        %v1084 = vlaneseq
        %v1085 = vshrl.u32 %v1084, 7
        %v1086 = vsub.s32 0, %v1085
        %v1087 = vrot.slane %v308, %v1086
        %v1088 = vlaneseq
        %v1089 = vshrl.u32 %v1088, 7
        %v1090 = vsub.s32 1, %v1089
        %v1091 = vrot.slane %v308, %v1090
        %v1092 = vlaneseq
        %v1093 = vshrl.u32 %v1092, 7
        %v1094 = vsub.s32 0, %v1093
        %v1095 = vrot.slane %v309, %v1094
        %v1096 = vlaneseq
        %v1097 = vshrl.u32 %v1096, 7
        %v1098 = vsub.s32 1, %v1097
        %v1099 = vrot.slane %v309, %v1098
        %v1100 = vlaneseq
        %v1101 = vshrl.u32 %v1100, 7
        %v1102 = vsub.s32 0, %v1101
        %v1103 = vrot.slane %v310, %v1102
        %v1104 = vlaneseq
        %v1105 = vshrl.u32 %v1104, 7
        %v1106 = vsub.s32 1, %v1105
        %v1107 = vrot.slane %v310, %v1106
        %v1108 = vlaneseq
        %v1109 = vshrl.u32 %v1108, 7
        %v1110 = vsub.s32 0, %v1109
        %v1111 = vrot.slane %v311, %v1110
        %v1112 = vlaneseq
        %v1113 = vshrl.u32 %v1112, 7
        %v1114 = vsub.s32 1, %v1113
        %v1115 = vrot.slane %v311, %v1114
        %v1124 = vmul.f32 %v824, %v1087
        %v1125 = vmul.f32 %v825, %v1091
        %v1126 = vmul.f32 %v826, %v1087
        %v1127 = vmul.f32 %v827, %v1091
        %v1128 = vmul.f32 %v828, %v1087
        %v1129 = vmul.f32 %v829, %v1091
        %v1130 = vmul.f32 %v830, %v1087
        %v1131 = vmul.f32 %v831, %v1091
        %v1132 = vmul.f32 %v832, %v1087
        %v1133 = vmul.f32 %v833, %v1091
        %v1134 = vmul.f32 %v834, %v1087
        %v1135 = vmul.f32 %v835, %v1091
        %v1136 = vmul.f32 %v836, %v1087
        %v1137 = vmul.f32 %v837, %v1091
        %v1138 = vmul.f32 %v838, %v1087
        %v1139 = vmul.f32 %v839, %v1091
        %v1140 = vmul.f32 %v840, %v1087
        %v1141 = vmul.f32 %v841, %v1091
        %v1142 = vmul.f32 %v842, %v1087
        %v1143 = vmul.f32 %v843, %v1091
        %v1144 = vmul.f32 %v844, %v1087
        %v1145 = vmul.f32 %v845, %v1091
        %v1146 = vmul.f32 %v846, %v1087
        %v1147 = vmul.f32 %v847, %v1091
        %v1148 = vmul.f32 %v848, %v1087
        %v1149 = vmul.f32 %v849, %v1091
        %v1150 = vmul.f32 %v850, %v1087
        %v1151 = vmul.f32 %v851, %v1091
        %v1152 = vmul.f32 %v852, %v1087
        %v1153 = vmul.f32 %v853, %v1091
        %v1154 = vmul.f32 %v854, %v1087
        %v1155 = vmul.f32 %v855, %v1091
        %v1156 = vmul.f32 %v856, %v1087
        %v1157 = vmul.f32 %v857, %v1091
        %v1158 = vmul.f32 %v858, %v1087
        %v1159 = vmul.f32 %v859, %v1091
        %v1160 = vmul.f32 %v860, %v1087
        %v1161 = vmul.f32 %v861, %v1091
        %v1162 = vmul.f32 %v862, %v1087
        %v1163 = vmul.f32 %v863, %v1091
        %v1164 = vmul.f32 %v864, %v1087
        %v1165 = vmul.f32 %v865, %v1091
        %v1166 = vmul.f32 %v866, %v1087
        %v1167 = vmul.f32 %v867, %v1091
        %v1168 = vmul.f32 %v868, %v1087
        %v1169 = vmul.f32 %v869, %v1091
        %v1170 = vmul.f32 %v870, %v1087
        %v1171 = vmul.f32 %v871, %v1091
        %v1172 = vmul.f32 %v872, %v1087
        %v1173 = vmul.f32 %v873, %v1091
        %v1174 = vmul.f32 %v874, %v1087
        %v1175 = vmul.f32 %v875, %v1091
        %v1176 = vmul.f32 %v876, %v1087
        %v1177 = vmul.f32 %v877, %v1091
        %v1178 = vmul.f32 %v878, %v1087
        %v1179 = vmul.f32 %v879, %v1091
        %v1180 = vmul.f32 %v880, %v1087
        %v1181 = vmul.f32 %v881, %v1091
        %v1182 = vmul.f32 %v882, %v1087
        %v1183 = vmul.f32 %v883, %v1091
        %v1184 = vmul.f32 %v884, %v1087
        %v1185 = vmul.f32 %v885, %v1091
        %v1186 = vmul.f32 %v886, %v1087
        %v1187 = vmul.f32 %v887, %v1091
        %v1188 = vmul.f32 %v888, %v1095
        %v1189 = vmul.f32 %v889, %v1099
        %v1190 = vmul.f32 %v890, %v1095
        %v1191 = vmul.f32 %v891, %v1099
        %v1192 = vmul.f32 %v892, %v1095
        %v1193 = vmul.f32 %v893, %v1099
        %v1194 = vmul.f32 %v894, %v1095
        %v1195 = vmul.f32 %v895, %v1099
        %v1196 = vmul.f32 %v896, %v1095
        %v1197 = vmul.f32 %v897, %v1099
        %v1198 = vmul.f32 %v898, %v1095
        %v1199 = vmul.f32 %v899, %v1099
        %v1200 = vmul.f32 %v900, %v1095
        %v1201 = vmul.f32 %v901, %v1099
        %v1202 = vmul.f32 %v902, %v1095
        %v1203 = vmul.f32 %v903, %v1099
        %v1204 = vmul.f32 %v904, %v1095
        %v1205 = vmul.f32 %v905, %v1099
        %v1206 = vmul.f32 %v906, %v1095
        %v1207 = vmul.f32 %v907, %v1099
        %v1208 = vmul.f32 %v908, %v1095
        %v1209 = vmul.f32 %v909, %v1099
        %v1210 = vmul.f32 %v910, %v1095
        %v1211 = vmul.f32 %v911, %v1099
        %v1212 = vmul.f32 %v912, %v1095
        %v1213 = vmul.f32 %v913, %v1099
        %v1214 = vmul.f32 %v914, %v1095
        %v1215 = vmul.f32 %v915, %v1099
        %v1216 = vmul.f32 %v916, %v1095
        %v1217 = vmul.f32 %v917, %v1099
        %v1218 = vmul.f32 %v918, %v1095
        %v1219 = vmul.f32 %v919, %v1099
        %v1220 = vmul.f32 %v920, %v1095
        %v1221 = vmul.f32 %v921, %v1099
        %v1222 = vmul.f32 %v922, %v1095
        %v1223 = vmul.f32 %v923, %v1099
        %v1224 = vmul.f32 %v924, %v1095
        %v1225 = vmul.f32 %v925, %v1099
        %v1226 = vmul.f32 %v926, %v1095
        %v1227 = vmul.f32 %v927, %v1099
        %v1228 = vmul.f32 %v928, %v1095
        %v1229 = vmul.f32 %v929, %v1099
        %v1230 = vmul.f32 %v930, %v1095
        %v1231 = vmul.f32 %v931, %v1099
        %v1232 = vmul.f32 %v932, %v1095
        %v1233 = vmul.f32 %v933, %v1099
        %v1234 = vmul.f32 %v934, %v1095
        %v1235 = vmul.f32 %v935, %v1099
        %v1236 = vmul.f32 %v936, %v1095
        %v1237 = vmul.f32 %v937, %v1099
        %v1238 = vmul.f32 %v938, %v1095
        %v1239 = vmul.f32 %v939, %v1099
        %v1240 = vmul.f32 %v940, %v1095
        %v1241 = vmul.f32 %v941, %v1099
        %v1242 = vmul.f32 %v942, %v1095
        %v1243 = vmul.f32 %v943, %v1099
        %v1244 = vmul.f32 %v944, %v1095
        %v1245 = vmul.f32 %v945, %v1099
        %v1246 = vmul.f32 %v946, %v1095
        %v1247 = vmul.f32 %v947, %v1099
        %v1248 = vmul.f32 %v948, %v1095
        %v1249 = vmul.f32 %v949, %v1099
        %v1250 = vmul.f32 %v950, %v1095
        %v1251 = vmul.f32 %v951, %v1099
        %v1252 = vmul.f32 %v952, %v1103
        %v1253 = vmul.f32 %v953, %v1107
        %v1254 = vmul.f32 %v954, %v1103
        %v1255 = vmul.f32 %v955, %v1107
        %v1256 = vmul.f32 %v956, %v1103
        %v1257 = vmul.f32 %v957, %v1107
        %v1258 = vmul.f32 %v958, %v1103
        %v1259 = vmul.f32 %v959, %v1107
        %v1260 = vmul.f32 %v960, %v1103
        %v1261 = vmul.f32 %v961, %v1107
        %v1262 = vmul.f32 %v962, %v1103
        %v1263 = vmul.f32 %v963, %v1107
        %v1264 = vmul.f32 %v964, %v1103
        %v1265 = vmul.f32 %v965, %v1107
        %v1266 = vmul.f32 %v966, %v1103
        %v1267 = vmul.f32 %v967, %v1107
        %v1268 = vmul.f32 %v968, %v1103
        %v1269 = vmul.f32 %v969, %v1107
        %v1270 = vmul.f32 %v970, %v1103
        %v1271 = vmul.f32 %v971, %v1107
        %v1272 = vmul.f32 %v972, %v1103
        %v1273 = vmul.f32 %v973, %v1107
        %v1274 = vmul.f32 %v974, %v1103
        %v1275 = vmul.f32 %v975, %v1107
        %v1276 = vmul.f32 %v976, %v1103
        %v1277 = vmul.f32 %v977, %v1107
        %v1278 = vmul.f32 %v978, %v1103
        %v1279 = vmul.f32 %v979, %v1107
        %v1280 = vmul.f32 %v980, %v1103
        %v1281 = vmul.f32 %v981, %v1107
        %v1282 = vmul.f32 %v982, %v1103
        %v1283 = vmul.f32 %v983, %v1107
        %v1284 = vmul.f32 %v984, %v1103
        %v1285 = vmul.f32 %v985, %v1107
        %v1286 = vmul.f32 %v986, %v1103
        %v1287 = vmul.f32 %v987, %v1107
        %v1288 = vmul.f32 %v988, %v1103
        %v1289 = vmul.f32 %v989, %v1107
        %v1290 = vmul.f32 %v990, %v1103
        %v1291 = vmul.f32 %v991, %v1107
        %v1292 = vmul.f32 %v992, %v1103
        %v1293 = vmul.f32 %v993, %v1107
        %v1294 = vmul.f32 %v994, %v1103
        %v1295 = vmul.f32 %v995, %v1107
        %v1296 = vmul.f32 %v996, %v1103
        %v1297 = vmul.f32 %v997, %v1107
        %v1298 = vmul.f32 %v998, %v1103
        %v1299 = vmul.f32 %v999, %v1107
        %v1300 = vmul.f32 %v1000, %v1103
        %v1301 = vmul.f32 %v1001, %v1107
        %v1302 = vmul.f32 %v1002, %v1103
        %v1303 = vmul.f32 %v1003, %v1107
        %v1304 = vmul.f32 %v1004, %v1103
        %v1305 = vmul.f32 %v1005, %v1107
        %v1306 = vmul.f32 %v1006, %v1103
        %v1307 = vmul.f32 %v1007, %v1107
        %v1308 = vmul.f32 %v1008, %v1103
        %v1309 = vmul.f32 %v1009, %v1107
        %v1310 = vmul.f32 %v1010, %v1103
        %v1311 = vmul.f32 %v1011, %v1107
        %v1312 = vmul.f32 %v1012, %v1103
        %v1313 = vmul.f32 %v1013, %v1107
        %v1314 = vmul.f32 %v1014, %v1103
        %v1315 = vmul.f32 %v1015, %v1107
        %v1316 = vmul.f32 %v1016, %v1111
        %v1317 = vmul.f32 %v1017, %v1115
        %v1318 = vmul.f32 %v1018, %v1111
        %v1319 = vmul.f32 %v1019, %v1115
        %v1320 = vmul.f32 %v1020, %v1111
        %v1321 = vmul.f32 %v1021, %v1115
        %v1322 = vmul.f32 %v1022, %v1111
        %v1323 = vmul.f32 %v1023, %v1115
        %v1324 = vmul.f32 %v1024, %v1111
        %v1325 = vmul.f32 %v1025, %v1115
        %v1326 = vmul.f32 %v1026, %v1111
        %v1327 = vmul.f32 %v1027, %v1115
        %v1328 = vmul.f32 %v1028, %v1111
        %v1329 = vmul.f32 %v1029, %v1115
        %v1330 = vmul.f32 %v1030, %v1111
        %v1331 = vmul.f32 %v1031, %v1115
        %v1332 = vmul.f32 %v1032, %v1111
        %v1333 = vmul.f32 %v1033, %v1115
        %v1334 = vmul.f32 %v1034, %v1111
        %v1335 = vmul.f32 %v1035, %v1115
        %v1336 = vmul.f32 %v1036, %v1111
        %v1337 = vmul.f32 %v1037, %v1115
        %v1338 = vmul.f32 %v1038, %v1111
        %v1339 = vmul.f32 %v1039, %v1115
        %v1340 = vmul.f32 %v1040, %v1111
        %v1341 = vmul.f32 %v1041, %v1115
        %v1342 = vmul.f32 %v1042, %v1111
        %v1343 = vmul.f32 %v1043, %v1115
        %v1344 = vmul.f32 %v1044, %v1111
        %v1345 = vmul.f32 %v1045, %v1115
        %v1346 = vmul.f32 %v1046, %v1111
        %v1347 = vmul.f32 %v1047, %v1115
        %v1348 = vmul.f32 %v1048, %v1111
        %v1349 = vmul.f32 %v1049, %v1115
        %v1350 = vmul.f32 %v1050, %v1111
        %v1351 = vmul.f32 %v1051, %v1115
        %v1352 = vmul.f32 %v1052, %v1111
        %v1353 = vmul.f32 %v1053, %v1115
        %v1354 = vmul.f32 %v1054, %v1111
        %v1355 = vmul.f32 %v1055, %v1115
        %v1356 = vmul.f32 %v1056, %v1111
        %v1357 = vmul.f32 %v1057, %v1115
        %v1358 = vmul.f32 %v1058, %v1111
        %v1359 = vmul.f32 %v1059, %v1115
        %v1360 = vmul.f32 %v1060, %v1111
        %v1361 = vmul.f32 %v1061, %v1115
        %v1362 = vmul.f32 %v1062, %v1111
        %v1363 = vmul.f32 %v1063, %v1115
        %v1364 = vmul.f32 %v1064, %v1111
        %v1365 = vmul.f32 %v1065, %v1115
        %v1366 = vmul.f32 %v1066, %v1111
        %v1367 = vmul.f32 %v1067, %v1115
        %v1368 = vmul.f32 %v1068, %v1111
        %v1369 = vmul.f32 %v1069, %v1115
        %v1370 = vmul.f32 %v1070, %v1111
        %v1371 = vmul.f32 %v1071, %v1115
        %v1372 = vmul.f32 %v1072, %v1111
        %v1373 = vmul.f32 %v1073, %v1115
        %v1374 = vmul.f32 %v1074, %v1111
        %v1375 = vmul.f32 %v1075, %v1115
        %v1376 = vmul.f32 %v1076, %v1111
        %v1377 = vmul.f32 %v1077, %v1115
        %v1378 = vmul.f32 %v1078, %v1111
        %v1379 = vmul.f32 %v1079, %v1115
        %1381 = vset.pattern.permute.xlu0 0
        %1382 = vperm.xlu0 %1381, %v696
        %v1383 = vpop.permute.xlu0 %1382
        %1386 = vset.pattern.permute.xlu0 0
        %1387 = vperm.xlu0 %1386, %v697
        %v1388 = vpop.permute.xlu0 %1387
        %1391 = vset.pattern.permute.xlu0 0
        %1392 = vperm.xlu0 %1391, %v698
        %v1393 = vpop.permute.xlu0 %1392
        %1396 = vset.pattern.permute.xlu0 0
        %1397 = vperm.xlu0 %1396, %v699
        %v1398 = vpop.permute.xlu0 %1397
        %1401 = vset.pattern.permute.xlu0 0
        %1402 = vperm.xlu0 %1401, %v700
        %v1403 = vpop.permute.xlu0 %1402
        %1406 = vset.pattern.permute.xlu0 0
        %1407 = vperm.xlu0 %1406, %v701
        %v1408 = vpop.permute.xlu0 %1407
        %1411 = vset.pattern.permute.xlu0 0
        %1412 = vperm.xlu0 %1411, %v702
        %v1413 = vpop.permute.xlu0 %1412
        %1416 = vset.pattern.permute.xlu0 0
        %1417 = vperm.xlu0 %1416, %v703
        %v1418 = vpop.permute.xlu0 %1417
        %1421 = vset.pattern.permute.xlu0 0
        %1422 = vperm.xlu0 %1421, %v704
        %v1423 = vpop.permute.xlu0 %1422
        %1426 = vset.pattern.permute.xlu0 0
        %1427 = vperm.xlu0 %1426, %v705
        %v1428 = vpop.permute.xlu0 %1427
        %1431 = vset.pattern.permute.xlu0 0
        %1432 = vperm.xlu0 %1431, %v706
        %v1433 = vpop.permute.xlu0 %1432
        %1436 = vset.pattern.permute.xlu0 0
        %1437 = vperm.xlu0 %1436, %v707
        %v1438 = vpop.permute.xlu0 %1437
        %1441 = vset.pattern.permute.xlu0 0
        %1442 = vperm.xlu0 %1441, %v708
        %v1443 = vpop.permute.xlu0 %1442
        %1446 = vset.pattern.permute.xlu0 0
        %1447 = vperm.xlu0 %1446, %v709
        %v1448 = vpop.permute.xlu0 %1447
        %1451 = vset.pattern.permute.xlu0 0
        %1452 = vperm.xlu0 %1451, %v710
        %v1453 = vpop.permute.xlu0 %1452
        %1456 = vset.pattern.permute.xlu0 0
        %1457 = vperm.xlu0 %1456, %v711
        %v1458 = vpop.permute.xlu0 %1457
        %1461 = vset.pattern.permute.xlu0 0
        %1462 = vperm.xlu0 %1461, %v712
        %v1463 = vpop.permute.xlu0 %1462
        %1466 = vset.pattern.permute.xlu0 0
        %1467 = vperm.xlu0 %1466, %v713
        %v1468 = vpop.permute.xlu0 %1467
        %1471 = vset.pattern.permute.xlu0 0
        %1472 = vperm.xlu0 %1471, %v714
        %v1473 = vpop.permute.xlu0 %1472
        %1476 = vset.pattern.permute.xlu0 0
        %1477 = vperm.xlu0 %1476, %v715
        %v1478 = vpop.permute.xlu0 %1477
        %1481 = vset.pattern.permute.xlu0 0
        %1482 = vperm.xlu0 %1481, %v716
        %v1483 = vpop.permute.xlu0 %1482
        %1486 = vset.pattern.permute.xlu0 0
        %1487 = vperm.xlu0 %1486, %v717
        %v1488 = vpop.permute.xlu0 %1487
        %1491 = vset.pattern.permute.xlu0 0
        %1492 = vperm.xlu0 %1491, %v718
        %v1493 = vpop.permute.xlu0 %1492
        %1496 = vset.pattern.permute.xlu0 0
        %1497 = vperm.xlu0 %1496, %v719
        %v1498 = vpop.permute.xlu0 %1497
        %1501 = vset.pattern.permute.xlu0 0
        %1502 = vperm.xlu0 %1501, %v720
        %v1503 = vpop.permute.xlu0 %1502
        %1506 = vset.pattern.permute.xlu0 0
        %1507 = vperm.xlu0 %1506, %v721
        %v1508 = vpop.permute.xlu0 %1507
        %1511 = vset.pattern.permute.xlu0 0
        %1512 = vperm.xlu0 %1511, %v722
        %v1513 = vpop.permute.xlu0 %1512
        %1516 = vset.pattern.permute.xlu0 0
        %1517 = vperm.xlu0 %1516, %v723
        %v1518 = vpop.permute.xlu0 %1517
        %1521 = vset.pattern.permute.xlu0 0
        %1522 = vperm.xlu0 %1521, %v724
        %v1523 = vpop.permute.xlu0 %1522
        %1526 = vset.pattern.permute.xlu0 0
        %1527 = vperm.xlu0 %1526, %v725
        %v1528 = vpop.permute.xlu0 %1527
        %1531 = vset.pattern.permute.xlu0 0
        %1532 = vperm.xlu0 %1531, %v726
        %v1533 = vpop.permute.xlu0 %1532
        %1536 = vset.pattern.permute.xlu0 0
        %1537 = vperm.xlu0 %1536, %v727
        %v1538 = vpop.permute.xlu0 %1537
        %1541 = vset.pattern.permute.xlu0 0
        %1542 = vperm.xlu0 %1541, %v728
        %v1543 = vpop.permute.xlu0 %1542
        %1546 = vset.pattern.permute.xlu0 0
        %1547 = vperm.xlu0 %1546, %v729
        %v1548 = vpop.permute.xlu0 %1547
        %1551 = vset.pattern.permute.xlu0 0
        %1552 = vperm.xlu0 %1551, %v730
        %v1553 = vpop.permute.xlu0 %1552
        %1556 = vset.pattern.permute.xlu0 0
        %1557 = vperm.xlu0 %1556, %v731
        %v1558 = vpop.permute.xlu0 %1557
        %1561 = vset.pattern.permute.xlu0 0
        %1562 = vperm.xlu0 %1561, %v732
        %v1563 = vpop.permute.xlu0 %1562
        %1566 = vset.pattern.permute.xlu0 0
        %1567 = vperm.xlu0 %1566, %v733
        %v1568 = vpop.permute.xlu0 %1567
        %1571 = vset.pattern.permute.xlu0 0
        %1572 = vperm.xlu0 %1571, %v734
        %v1573 = vpop.permute.xlu0 %1572
        %1576 = vset.pattern.permute.xlu0 0
        %1577 = vperm.xlu0 %1576, %v735
        %v1578 = vpop.permute.xlu0 %1577
        %1581 = vset.pattern.permute.xlu0 0
        %1582 = vperm.xlu0 %1581, %v736
        %v1583 = vpop.permute.xlu0 %1582
        %1586 = vset.pattern.permute.xlu0 0
        %1587 = vperm.xlu0 %1586, %v737
        %v1588 = vpop.permute.xlu0 %1587
        %1591 = vset.pattern.permute.xlu0 0
        %1592 = vperm.xlu0 %1591, %v738
        %v1593 = vpop.permute.xlu0 %1592
        %1596 = vset.pattern.permute.xlu0 0
        %1597 = vperm.xlu0 %1596, %v739
        %v1598 = vpop.permute.xlu0 %1597
        %1601 = vset.pattern.permute.xlu0 0
        %1602 = vperm.xlu0 %1601, %v740
        %v1603 = vpop.permute.xlu0 %1602
        %1606 = vset.pattern.permute.xlu0 0
        %1607 = vperm.xlu0 %1606, %v741
        %v1608 = vpop.permute.xlu0 %1607
        %1611 = vset.pattern.permute.xlu0 0
        %1612 = vperm.xlu0 %1611, %v742
        %v1613 = vpop.permute.xlu0 %1612
        %1616 = vset.pattern.permute.xlu0 0
        %1617 = vperm.xlu0 %1616, %v743
        %v1618 = vpop.permute.xlu0 %1617
        %1621 = vset.pattern.permute.xlu0 0
        %1622 = vperm.xlu0 %1621, %v744
        %v1623 = vpop.permute.xlu0 %1622
        %1626 = vset.pattern.permute.xlu0 0
        %1627 = vperm.xlu0 %1626, %v745
        %v1628 = vpop.permute.xlu0 %1627
        %1631 = vset.pattern.permute.xlu0 0
        %1632 = vperm.xlu0 %1631, %v746
        %v1633 = vpop.permute.xlu0 %1632
        %1636 = vset.pattern.permute.xlu0 0
        %1637 = vperm.xlu0 %1636, %v747
        %v1638 = vpop.permute.xlu0 %1637
        %1641 = vset.pattern.permute.xlu0 0
        %1642 = vperm.xlu0 %1641, %v748
        %v1643 = vpop.permute.xlu0 %1642
        %1646 = vset.pattern.permute.xlu0 0
        %1647 = vperm.xlu0 %1646, %v749
        %v1648 = vpop.permute.xlu0 %1647
        %1651 = vset.pattern.permute.xlu0 0
        %1652 = vperm.xlu0 %1651, %v750
        %v1653 = vpop.permute.xlu0 %1652
        %1656 = vset.pattern.permute.xlu0 0
        %1657 = vperm.xlu0 %1656, %v751
        %v1658 = vpop.permute.xlu0 %1657
        %1661 = vset.pattern.permute.xlu0 0
        %1662 = vperm.xlu0 %1661, %v752
        %v1663 = vpop.permute.xlu0 %1662
        %1666 = vset.pattern.permute.xlu0 0
        %1667 = vperm.xlu0 %1666, %v753
        %v1668 = vpop.permute.xlu0 %1667
        %1671 = vset.pattern.permute.xlu0 0
        %1672 = vperm.xlu0 %1671, %v754
        %v1673 = vpop.permute.xlu0 %1672
        %1676 = vset.pattern.permute.xlu0 0
        %1677 = vperm.xlu0 %1676, %v755
        %v1678 = vpop.permute.xlu0 %1677
        %1681 = vset.pattern.permute.xlu0 0
        %1682 = vperm.xlu0 %1681, %v756
        %v1683 = vpop.permute.xlu0 %1682
        %1686 = vset.pattern.permute.xlu0 0
        %1687 = vperm.xlu0 %1686, %v757
        %v1688 = vpop.permute.xlu0 %1687
        %1691 = vset.pattern.permute.xlu0 0
        %1692 = vperm.xlu0 %1691, %v758
        %v1693 = vpop.permute.xlu0 %1692
        %1696 = vset.pattern.permute.xlu0 0
        %1697 = vperm.xlu0 %1696, %v759
        %v1698 = vpop.permute.xlu0 %1697
        %1701 = vset.pattern.permute.xlu0 0
        %1702 = vperm.xlu0 %1701, %v760
        %v1703 = vpop.permute.xlu0 %1702
        %1706 = vset.pattern.permute.xlu0 0
        %1707 = vperm.xlu0 %1706, %v761
        %v1708 = vpop.permute.xlu0 %1707
        %1711 = vset.pattern.permute.xlu0 0
        %1712 = vperm.xlu0 %1711, %v762
        %v1713 = vpop.permute.xlu0 %1712
        %1716 = vset.pattern.permute.xlu0 0
        %1717 = vperm.xlu0 %1716, %v763
        %v1718 = vpop.permute.xlu0 %1717
        %1721 = vset.pattern.permute.xlu0 0
        %1722 = vperm.xlu0 %1721, %v764
        %v1723 = vpop.permute.xlu0 %1722
        %1726 = vset.pattern.permute.xlu0 0
        %1727 = vperm.xlu0 %1726, %v765
        %v1728 = vpop.permute.xlu0 %1727
        %1731 = vset.pattern.permute.xlu0 0
        %1732 = vperm.xlu0 %1731, %v766
        %v1733 = vpop.permute.xlu0 %1732
        %1736 = vset.pattern.permute.xlu0 0
        %1737 = vperm.xlu0 %1736, %v767
        %v1738 = vpop.permute.xlu0 %1737
        %1741 = vset.pattern.permute.xlu0 0
        %1742 = vperm.xlu0 %1741, %v768
        %v1743 = vpop.permute.xlu0 %1742
        %1746 = vset.pattern.permute.xlu0 0
        %1747 = vperm.xlu0 %1746, %v769
        %v1748 = vpop.permute.xlu0 %1747
        %1751 = vset.pattern.permute.xlu0 0
        %1752 = vperm.xlu0 %1751, %v770
        %v1753 = vpop.permute.xlu0 %1752
        %1756 = vset.pattern.permute.xlu0 0
        %1757 = vperm.xlu0 %1756, %v771
        %v1758 = vpop.permute.xlu0 %1757
        %1761 = vset.pattern.permute.xlu0 0
        %1762 = vperm.xlu0 %1761, %v772
        %v1763 = vpop.permute.xlu0 %1762
        %1766 = vset.pattern.permute.xlu0 0
        %1767 = vperm.xlu0 %1766, %v773
        %v1768 = vpop.permute.xlu0 %1767
        %1771 = vset.pattern.permute.xlu0 0
        %1772 = vperm.xlu0 %1771, %v774
        %v1773 = vpop.permute.xlu0 %1772
        %1776 = vset.pattern.permute.xlu0 0
        %1777 = vperm.xlu0 %1776, %v775
        %v1778 = vpop.permute.xlu0 %1777
        %1781 = vset.pattern.permute.xlu0 0
        %1782 = vperm.xlu0 %1781, %v776
        %v1783 = vpop.permute.xlu0 %1782
        %1786 = vset.pattern.permute.xlu0 0
        %1787 = vperm.xlu0 %1786, %v777
        %v1788 = vpop.permute.xlu0 %1787
        %1791 = vset.pattern.permute.xlu0 0
        %1792 = vperm.xlu0 %1791, %v778
        %v1793 = vpop.permute.xlu0 %1792
        %1796 = vset.pattern.permute.xlu0 0
        %1797 = vperm.xlu0 %1796, %v779
        %v1798 = vpop.permute.xlu0 %1797
        %1801 = vset.pattern.permute.xlu0 0
        %1802 = vperm.xlu0 %1801, %v780
        %v1803 = vpop.permute.xlu0 %1802
        %1806 = vset.pattern.permute.xlu0 0
        %1807 = vperm.xlu0 %1806, %v781
        %v1808 = vpop.permute.xlu0 %1807
        %1811 = vset.pattern.permute.xlu0 0
        %1812 = vperm.xlu0 %1811, %v782
        %v1813 = vpop.permute.xlu0 %1812
        %1816 = vset.pattern.permute.xlu0 0
        %1817 = vperm.xlu0 %1816, %v783
        %v1818 = vpop.permute.xlu0 %1817
        %1821 = vset.pattern.permute.xlu0 0
        %1822 = vperm.xlu0 %1821, %v784
        %v1823 = vpop.permute.xlu0 %1822
        %1826 = vset.pattern.permute.xlu0 0
        %1827 = vperm.xlu0 %1826, %v785
        %v1828 = vpop.permute.xlu0 %1827
        %1831 = vset.pattern.permute.xlu0 0
        %1832 = vperm.xlu0 %1831, %v786
        %v1833 = vpop.permute.xlu0 %1832
        %1836 = vset.pattern.permute.xlu0 0
        %1837 = vperm.xlu0 %1836, %v787
        %v1838 = vpop.permute.xlu0 %1837
        %1841 = vset.pattern.permute.xlu0 0
        %1842 = vperm.xlu0 %1841, %v788
        %v1843 = vpop.permute.xlu0 %1842
        %1846 = vset.pattern.permute.xlu0 0
        %1847 = vperm.xlu0 %1846, %v789
        %v1848 = vpop.permute.xlu0 %1847
        %1851 = vset.pattern.permute.xlu0 0
        %1852 = vperm.xlu0 %1851, %v790
        %v1853 = vpop.permute.xlu0 %1852
        %1856 = vset.pattern.permute.xlu0 0
        %1857 = vperm.xlu0 %1856, %v791
        %v1858 = vpop.permute.xlu0 %1857
        %1861 = vset.pattern.permute.xlu0 0
        %1862 = vperm.xlu0 %1861, %v792
        %v1863 = vpop.permute.xlu0 %1862
        %1866 = vset.pattern.permute.xlu0 0
        %1867 = vperm.xlu0 %1866, %v793
        %v1868 = vpop.permute.xlu0 %1867
        %1871 = vset.pattern.permute.xlu0 0
        %1872 = vperm.xlu0 %1871, %v794
        %v1873 = vpop.permute.xlu0 %1872
        %1876 = vset.pattern.permute.xlu0 0
        %1877 = vperm.xlu0 %1876, %v795
        %v1878 = vpop.permute.xlu0 %1877
        %1881 = vset.pattern.permute.xlu0 0
        %1882 = vperm.xlu0 %1881, %v796
        %v1883 = vpop.permute.xlu0 %1882
        %1886 = vset.pattern.permute.xlu0 0
        %1887 = vperm.xlu0 %1886, %v797
        %v1888 = vpop.permute.xlu0 %1887
        %1891 = vset.pattern.permute.xlu0 0
        %1892 = vperm.xlu0 %1891, %v798
        %v1893 = vpop.permute.xlu0 %1892
        %1896 = vset.pattern.permute.xlu0 0
        %1897 = vperm.xlu0 %1896, %v799
        %v1898 = vpop.permute.xlu0 %1897
        %1901 = vset.pattern.permute.xlu0 0
        %1902 = vperm.xlu0 %1901, %v800
        %v1903 = vpop.permute.xlu0 %1902
        %1906 = vset.pattern.permute.xlu0 0
        %1907 = vperm.xlu0 %1906, %v801
        %v1908 = vpop.permute.xlu0 %1907
        %1911 = vset.pattern.permute.xlu0 0
        %1912 = vperm.xlu0 %1911, %v802
        %v1913 = vpop.permute.xlu0 %1912
        %1916 = vset.pattern.permute.xlu0 0
        %1917 = vperm.xlu0 %1916, %v803
        %v1918 = vpop.permute.xlu0 %1917
        %1921 = vset.pattern.permute.xlu0 0
        %1922 = vperm.xlu0 %1921, %v804
        %v1923 = vpop.permute.xlu0 %1922
        %1926 = vset.pattern.permute.xlu0 0
        %1927 = vperm.xlu0 %1926, %v805
        %v1928 = vpop.permute.xlu0 %1927
        %1931 = vset.pattern.permute.xlu0 0
        %1932 = vperm.xlu0 %1931, %v806
        %v1933 = vpop.permute.xlu0 %1932
        %1936 = vset.pattern.permute.xlu0 0
        %1937 = vperm.xlu0 %1936, %v807
        %v1938 = vpop.permute.xlu0 %1937
        %1941 = vset.pattern.permute.xlu0 0
        %1942 = vperm.xlu0 %1941, %v808
        %v1943 = vpop.permute.xlu0 %1942
        %1946 = vset.pattern.permute.xlu0 0
        %1947 = vperm.xlu0 %1946, %v809
        %v1948 = vpop.permute.xlu0 %1947
        %1951 = vset.pattern.permute.xlu0 0
        %1952 = vperm.xlu0 %1951, %v810
        %v1953 = vpop.permute.xlu0 %1952
        %1956 = vset.pattern.permute.xlu0 0
        %1957 = vperm.xlu0 %1956, %v811
        %v1958 = vpop.permute.xlu0 %1957
        %1961 = vset.pattern.permute.xlu0 0
        %1962 = vperm.xlu0 %1961, %v812
        %v1963 = vpop.permute.xlu0 %1962
        %1966 = vset.pattern.permute.xlu0 0
        %1967 = vperm.xlu0 %1966, %v813
        %v1968 = vpop.permute.xlu0 %1967
        %1971 = vset.pattern.permute.xlu0 0
        %1972 = vperm.xlu0 %1971, %v814
        %v1973 = vpop.permute.xlu0 %1972
        %1976 = vset.pattern.permute.xlu0 0
        %1977 = vperm.xlu0 %1976, %v815
        %v1978 = vpop.permute.xlu0 %1977
        %1981 = vset.pattern.permute.xlu0 0
        %1982 = vperm.xlu0 %1981, %v816
        %v1983 = vpop.permute.xlu0 %1982
        %1986 = vset.pattern.permute.xlu0 0
        %1987 = vperm.xlu0 %1986, %v817
        %v1988 = vpop.permute.xlu0 %1987
        %1991 = vset.pattern.permute.xlu0 0
        %1992 = vperm.xlu0 %1991, %v818
        %v1993 = vpop.permute.xlu0 %1992
        %1996 = vset.pattern.permute.xlu0 0
        %1997 = vperm.xlu0 %1996, %v819
        %v1998 = vpop.permute.xlu0 %1997
        %2001 = vset.pattern.permute.xlu0 0
        %2002 = vperm.xlu0 %2001, %v820
        %v2003 = vpop.permute.xlu0 %2002
        %2006 = vset.pattern.permute.xlu0 0
        %2007 = vperm.xlu0 %2006, %v821
        %v2008 = vpop.permute.xlu0 %2007
        %2011 = vset.pattern.permute.xlu0 0
        %2012 = vperm.xlu0 %2011, %v822
        %v2013 = vpop.permute.xlu0 %2012
        %2016 = vset.pattern.permute.xlu0 0
        %2017 = vperm.xlu0 %2016, %v823
        %v2018 = vpop.permute.xlu0 %2017
        %v2020 = vmul.f32 %v1124, %v1383
        %v2021 = vmul.f32 %v1125, %v1383
        %v2022 = vmul.f32 %v1126, %v1388
        %v2023 = vmul.f32 %v1127, %v1388
        %v2024 = vmul.f32 %v1128, %v1393
        %v2025 = vmul.f32 %v1129, %v1393
        %v2026 = vmul.f32 %v1130, %v1398
        %v2027 = vmul.f32 %v1131, %v1398
        %v2028 = vmul.f32 %v1132, %v1403
        %v2029 = vmul.f32 %v1133, %v1403
        %v2030 = vmul.f32 %v1134, %v1408
        %v2031 = vmul.f32 %v1135, %v1408
        %v2032 = vmul.f32 %v1136, %v1413
        %v2033 = vmul.f32 %v1137, %v1413
        %v2034 = vmul.f32 %v1138, %v1418
        %v2035 = vmul.f32 %v1139, %v1418
        %v2036 = vmul.f32 %v1140, %v1423
        %v2037 = vmul.f32 %v1141, %v1423
        %v2038 = vmul.f32 %v1142, %v1428
        %v2039 = vmul.f32 %v1143, %v1428
        %v2040 = vmul.f32 %v1144, %v1433
        %v2041 = vmul.f32 %v1145, %v1433
        %v2042 = vmul.f32 %v1146, %v1438
        %v2043 = vmul.f32 %v1147, %v1438
        %v2044 = vmul.f32 %v1148, %v1443
        %v2045 = vmul.f32 %v1149, %v1443
        %v2046 = vmul.f32 %v1150, %v1448
        %v2047 = vmul.f32 %v1151, %v1448
        %v2048 = vmul.f32 %v1152, %v1453
        %v2049 = vmul.f32 %v1153, %v1453
        %v2050 = vmul.f32 %v1154, %v1458
        %v2051 = vmul.f32 %v1155, %v1458
        %v2052 = vmul.f32 %v1156, %v1463
        %v2053 = vmul.f32 %v1157, %v1463
        %v2054 = vmul.f32 %v1158, %v1468
        %v2055 = vmul.f32 %v1159, %v1468
        %v2056 = vmul.f32 %v1160, %v1473
        %v2057 = vmul.f32 %v1161, %v1473
        %v2058 = vmul.f32 %v1162, %v1478
        %v2059 = vmul.f32 %v1163, %v1478
        %v2060 = vmul.f32 %v1164, %v1483
        %v2061 = vmul.f32 %v1165, %v1483
        %v2062 = vmul.f32 %v1166, %v1488
        %v2063 = vmul.f32 %v1167, %v1488
        %v2064 = vmul.f32 %v1168, %v1493
        %v2065 = vmul.f32 %v1169, %v1493
        %v2066 = vmul.f32 %v1170, %v1498
        %v2067 = vmul.f32 %v1171, %v1498
        %v2068 = vmul.f32 %v1172, %v1503
        %v2069 = vmul.f32 %v1173, %v1503
        %v2070 = vmul.f32 %v1174, %v1508
        %v2071 = vmul.f32 %v1175, %v1508
        %v2072 = vmul.f32 %v1176, %v1513
        %v2073 = vmul.f32 %v1177, %v1513
        %v2074 = vmul.f32 %v1178, %v1518
        %v2075 = vmul.f32 %v1179, %v1518
        %v2076 = vmul.f32 %v1180, %v1523
        %v2077 = vmul.f32 %v1181, %v1523
        %v2078 = vmul.f32 %v1182, %v1528
        %v2079 = vmul.f32 %v1183, %v1528
        %v2080 = vmul.f32 %v1184, %v1533
        %v2081 = vmul.f32 %v1185, %v1533
        %v2082 = vmul.f32 %v1186, %v1538
        %v2083 = vmul.f32 %v1187, %v1538
        %v2084 = vmul.f32 %v1188, %v1543
        %v2085 = vmul.f32 %v1189, %v1543
        %v2086 = vmul.f32 %v1190, %v1548
        %v2087 = vmul.f32 %v1191, %v1548
        %v2088 = vmul.f32 %v1192, %v1553
        %v2089 = vmul.f32 %v1193, %v1553
        %v2090 = vmul.f32 %v1194, %v1558
        %v2091 = vmul.f32 %v1195, %v1558
        %v2092 = vmul.f32 %v1196, %v1563
        %v2093 = vmul.f32 %v1197, %v1563
        %v2094 = vmul.f32 %v1198, %v1568
        %v2095 = vmul.f32 %v1199, %v1568
        %v2096 = vmul.f32 %v1200, %v1573
        %v2097 = vmul.f32 %v1201, %v1573
        %v2098 = vmul.f32 %v1202, %v1578
        %v2099 = vmul.f32 %v1203, %v1578
        %v2100 = vmul.f32 %v1204, %v1583
        %v2101 = vmul.f32 %v1205, %v1583
        %v2102 = vmul.f32 %v1206, %v1588
        %v2103 = vmul.f32 %v1207, %v1588
        %v2104 = vmul.f32 %v1208, %v1593
        %v2105 = vmul.f32 %v1209, %v1593
        %v2106 = vmul.f32 %v1210, %v1598
        %v2107 = vmul.f32 %v1211, %v1598
        %v2108 = vmul.f32 %v1212, %v1603
        %v2109 = vmul.f32 %v1213, %v1603
        %v2110 = vmul.f32 %v1214, %v1608
        %v2111 = vmul.f32 %v1215, %v1608
        %v2112 = vmul.f32 %v1216, %v1613
        %v2113 = vmul.f32 %v1217, %v1613
        %v2114 = vmul.f32 %v1218, %v1618
        %v2115 = vmul.f32 %v1219, %v1618
        %v2116 = vmul.f32 %v1220, %v1623
        %v2117 = vmul.f32 %v1221, %v1623
        %v2118 = vmul.f32 %v1222, %v1628
        %v2119 = vmul.f32 %v1223, %v1628
        %v2120 = vmul.f32 %v1224, %v1633
        %v2121 = vmul.f32 %v1225, %v1633
        %v2122 = vmul.f32 %v1226, %v1638
        %v2123 = vmul.f32 %v1227, %v1638
        %v2124 = vmul.f32 %v1228, %v1643
        %v2125 = vmul.f32 %v1229, %v1643
        %v2126 = vmul.f32 %v1230, %v1648
        %v2127 = vmul.f32 %v1231, %v1648
        %v2128 = vmul.f32 %v1232, %v1653
        %v2129 = vmul.f32 %v1233, %v1653
        %v2130 = vmul.f32 %v1234, %v1658
        %v2131 = vmul.f32 %v1235, %v1658
        %v2132 = vmul.f32 %v1236, %v1663
        %v2133 = vmul.f32 %v1237, %v1663
        %v2134 = vmul.f32 %v1238, %v1668
        %v2135 = vmul.f32 %v1239, %v1668
        %v2136 = vmul.f32 %v1240, %v1673
        %v2137 = vmul.f32 %v1241, %v1673
        %v2138 = vmul.f32 %v1242, %v1678
        %v2139 = vmul.f32 %v1243, %v1678
        %v2140 = vmul.f32 %v1244, %v1683
        %v2141 = vmul.f32 %v1245, %v1683
        %v2142 = vmul.f32 %v1246, %v1688
        %v2143 = vmul.f32 %v1247, %v1688
        %v2144 = vmul.f32 %v1248, %v1693
        %v2145 = vmul.f32 %v1249, %v1693
        %v2146 = vmul.f32 %v1250, %v1698
        %v2147 = vmul.f32 %v1251, %v1698
        %v2148 = vmul.f32 %v1252, %v1703
        %v2149 = vmul.f32 %v1253, %v1703
        %v2150 = vmul.f32 %v1254, %v1708
        %v2151 = vmul.f32 %v1255, %v1708
        %v2152 = vmul.f32 %v1256, %v1713
        %v2153 = vmul.f32 %v1257, %v1713
        %v2154 = vmul.f32 %v1258, %v1718
        %v2155 = vmul.f32 %v1259, %v1718
        %v2156 = vmul.f32 %v1260, %v1723
        %v2157 = vmul.f32 %v1261, %v1723
        %v2158 = vmul.f32 %v1262, %v1728
        %v2159 = vmul.f32 %v1263, %v1728
        %v2160 = vmul.f32 %v1264, %v1733
        %v2161 = vmul.f32 %v1265, %v1733
        %v2162 = vmul.f32 %v1266, %v1738
        %v2163 = vmul.f32 %v1267, %v1738
        %v2164 = vmul.f32 %v1268, %v1743
        %v2165 = vmul.f32 %v1269, %v1743
        %v2166 = vmul.f32 %v1270, %v1748
        %v2167 = vmul.f32 %v1271, %v1748
        %v2168 = vmul.f32 %v1272, %v1753
        %v2169 = vmul.f32 %v1273, %v1753
        %v2170 = vmul.f32 %v1274, %v1758
        %v2171 = vmul.f32 %v1275, %v1758
        %v2172 = vmul.f32 %v1276, %v1763
        %v2173 = vmul.f32 %v1277, %v1763
        %v2174 = vmul.f32 %v1278, %v1768
        %v2175 = vmul.f32 %v1279, %v1768
        %v2176 = vmul.f32 %v1280, %v1773
        %v2177 = vmul.f32 %v1281, %v1773
        %v2178 = vmul.f32 %v1282, %v1778
        %v2179 = vmul.f32 %v1283, %v1778
        %v2180 = vmul.f32 %v1284, %v1783
        %v2181 = vmul.f32 %v1285, %v1783
        %v2182 = vmul.f32 %v1286, %v1788
        %v2183 = vmul.f32 %v1287, %v1788
        %v2184 = vmul.f32 %v1288, %v1793
        %v2185 = vmul.f32 %v1289, %v1793
        %v2186 = vmul.f32 %v1290, %v1798
        %v2187 = vmul.f32 %v1291, %v1798
        %v2188 = vmul.f32 %v1292, %v1803
        %v2189 = vmul.f32 %v1293, %v1803
        %v2190 = vmul.f32 %v1294, %v1808
        %v2191 = vmul.f32 %v1295, %v1808
        %v2192 = vmul.f32 %v1296, %v1813
        %v2193 = vmul.f32 %v1297, %v1813
        %v2194 = vmul.f32 %v1298, %v1818
        %v2195 = vmul.f32 %v1299, %v1818
        %v2196 = vmul.f32 %v1300, %v1823
        %v2197 = vmul.f32 %v1301, %v1823
        %v2198 = vmul.f32 %v1302, %v1828
        %v2199 = vmul.f32 %v1303, %v1828
        %v2200 = vmul.f32 %v1304, %v1833
        %v2201 = vmul.f32 %v1305, %v1833
        %v2202 = vmul.f32 %v1306, %v1838
        %v2203 = vmul.f32 %v1307, %v1838
        %v2204 = vmul.f32 %v1308, %v1843
        %v2205 = vmul.f32 %v1309, %v1843
        %v2206 = vmul.f32 %v1310, %v1848
        %v2207 = vmul.f32 %v1311, %v1848
        %v2208 = vmul.f32 %v1312, %v1853
        %v2209 = vmul.f32 %v1313, %v1853
        %v2210 = vmul.f32 %v1314, %v1858
        %v2211 = vmul.f32 %v1315, %v1858
        %v2212 = vmul.f32 %v1316, %v1863
        %v2213 = vmul.f32 %v1317, %v1863
        %v2214 = vmul.f32 %v1318, %v1868
        %v2215 = vmul.f32 %v1319, %v1868
        %v2216 = vmul.f32 %v1320, %v1873
        %v2217 = vmul.f32 %v1321, %v1873
        %v2218 = vmul.f32 %v1322, %v1878
        %v2219 = vmul.f32 %v1323, %v1878
        %v2220 = vmul.f32 %v1324, %v1883
        %v2221 = vmul.f32 %v1325, %v1883
        %v2222 = vmul.f32 %v1326, %v1888
        %v2223 = vmul.f32 %v1327, %v1888
        %v2224 = vmul.f32 %v1328, %v1893
        %v2225 = vmul.f32 %v1329, %v1893
        %v2226 = vmul.f32 %v1330, %v1898
        %v2227 = vmul.f32 %v1331, %v1898
        %v2228 = vmul.f32 %v1332, %v1903
        %v2229 = vmul.f32 %v1333, %v1903
        %v2230 = vmul.f32 %v1334, %v1908
        %v2231 = vmul.f32 %v1335, %v1908
        %v2232 = vmul.f32 %v1336, %v1913
        %v2233 = vmul.f32 %v1337, %v1913
        %v2234 = vmul.f32 %v1338, %v1918
        %v2235 = vmul.f32 %v1339, %v1918
        %v2236 = vmul.f32 %v1340, %v1923
        %v2237 = vmul.f32 %v1341, %v1923
        %v2238 = vmul.f32 %v1342, %v1928
        %v2239 = vmul.f32 %v1343, %v1928
        %v2240 = vmul.f32 %v1344, %v1933
        %v2241 = vmul.f32 %v1345, %v1933
        %v2242 = vmul.f32 %v1346, %v1938
        %v2243 = vmul.f32 %v1347, %v1938
        %v2244 = vmul.f32 %v1348, %v1943
        %v2245 = vmul.f32 %v1349, %v1943
        %v2246 = vmul.f32 %v1350, %v1948
        %v2247 = vmul.f32 %v1351, %v1948
        %v2248 = vmul.f32 %v1352, %v1953
        %v2249 = vmul.f32 %v1353, %v1953
        %v2250 = vmul.f32 %v1354, %v1958
        %v2251 = vmul.f32 %v1355, %v1958
        %v2252 = vmul.f32 %v1356, %v1963
        %v2253 = vmul.f32 %v1357, %v1963
        %v2254 = vmul.f32 %v1358, %v1968
        %v2255 = vmul.f32 %v1359, %v1968
        %v2256 = vmul.f32 %v1360, %v1973
        %v2257 = vmul.f32 %v1361, %v1973
        %v2258 = vmul.f32 %v1362, %v1978
        %v2259 = vmul.f32 %v1363, %v1978
        %v2260 = vmul.f32 %v1364, %v1983
        %v2261 = vmul.f32 %v1365, %v1983
        %v2262 = vmul.f32 %v1366, %v1988
        %v2263 = vmul.f32 %v1367, %v1988
        %v2264 = vmul.f32 %v1368, %v1993
        %v2265 = vmul.f32 %v1369, %v1993
        %v2266 = vmul.f32 %v1370, %v1998
        %v2267 = vmul.f32 %v1371, %v1998
        %v2268 = vmul.f32 %v1372, %v2003
        %v2269 = vmul.f32 %v1373, %v2003
        %v2270 = vmul.f32 %v1374, %v2008
        %v2271 = vmul.f32 %v1375, %v2008
        %v2272 = vmul.f32 %v1376, %v2013
        %v2273 = vmul.f32 %v1377, %v2013
        %v2274 = vmul.f32 %v1378, %v2018
        %v2275 = vmul.f32 %v1379, %v2018
        %2276 = vst [vmem:[%s278] sm:$0xff] %v2020
        %2277 = vst [vmem:[%s278 + $0x8] sm:$0xff] %v2021
        %2278 = vst [vmem:[%s278 + $0x10] sm:$0xff] %v2022
        %2279 = vst [vmem:[%s278 + $0x18] sm:$0xff] %v2023
        %2280 = vst [vmem:[%s278 + $0x20] sm:$0xff] %v2024
        %2281 = vst [vmem:[%s278 + $0x28] sm:$0xff] %v2025
        %2282 = vst [vmem:[%s278 + $0x30] sm:$0xff] %v2026
        %2283 = vst [vmem:[%s278 + $0x38] sm:$0xff] %v2027
        %2284 = vst [vmem:[%s278 + $0x40] sm:$0xff] %v2028
        %2285 = vst [vmem:[%s278 + $0x48] sm:$0xff] %v2029
        %2286 = vst [vmem:[%s278 + $0x50] sm:$0xff] %v2030
        %2287 = vst [vmem:[%s278 + $0x58] sm:$0xff] %v2031
        %2288 = vst [vmem:[%s278 + $0x60] sm:$0xff] %v2032
        %2289 = vst [vmem:[%s278 + $0x68] sm:$0xff] %v2033
        %2290 = vst [vmem:[%s278 + $0x70] sm:$0xff] %v2034
        %2291 = vst [vmem:[%s278 + $0x78] sm:$0xff] %v2035
        %2292 = vst [vmem:[%s278 + $0x80] sm:$0xff] %v2036
        %2293 = vst [vmem:[%s278 + $0x88] sm:$0xff] %v2037
        %2294 = vst [vmem:[%s278 + $0x90] sm:$0xff] %v2038
        %2295 = vst [vmem:[%s278 + $0x98] sm:$0xff] %v2039
        %2296 = vst [vmem:[%s278 + $0xa0] sm:$0xff] %v2040
        %2297 = vst [vmem:[%s278 + $0xa8] sm:$0xff] %v2041
        %2298 = vst [vmem:[%s278 + $0xb0] sm:$0xff] %v2042
        %2299 = vst [vmem:[%s278 + $0xb8] sm:$0xff] %v2043
        %2300 = vst [vmem:[%s278 + $0xc0] sm:$0xff] %v2044
        %2301 = vst [vmem:[%s278 + $0xc8] sm:$0xff] %v2045
        %2302 = vst [vmem:[%s278 + $0xd0] sm:$0xff] %v2046
        %2303 = vst [vmem:[%s278 + $0xd8] sm:$0xff] %v2047
        %2304 = vst [vmem:[%s278 + $0xe0] sm:$0xff] %v2048
        %2305 = vst [vmem:[%s278 + $0xe8] sm:$0xff] %v2049
        %2306 = vst [vmem:[%s278 + $0xf0] sm:$0xff] %v2050
        %2307 = vst [vmem:[%s278 + $0xf8] sm:$0xff] %v2051
        %2308 = vst [vmem:[%s278 + $0x100] sm:$0xff] %v2052
        %2309 = vst [vmem:[%s278 + $0x108] sm:$0xff] %v2053
        %2310 = vst [vmem:[%s278 + $0x110] sm:$0xff] %v2054
        %2311 = vst [vmem:[%s278 + $0x118] sm:$0xff] %v2055
        %2312 = vst [vmem:[%s278 + $0x120] sm:$0xff] %v2056
        %2313 = vst [vmem:[%s278 + $0x128] sm:$0xff] %v2057
        %2314 = vst [vmem:[%s278 + $0x130] sm:$0xff] %v2058
        %2315 = vst [vmem:[%s278 + $0x138] sm:$0xff] %v2059
        %2316 = vst [vmem:[%s278 + $0x140] sm:$0xff] %v2060
        %2317 = vst [vmem:[%s278 + $0x148] sm:$0xff] %v2061
        %2318 = vst [vmem:[%s278 + $0x150] sm:$0xff] %v2062
        %2319 = vst [vmem:[%s278 + $0x158] sm:$0xff] %v2063
        %2320 = vst [vmem:[%s278 + $0x160] sm:$0xff] %v2064
        %2321 = vst [vmem:[%s278 + $0x168] sm:$0xff] %v2065
        %2322 = vst [vmem:[%s278 + $0x170] sm:$0xff] %v2066
        %2323 = vst [vmem:[%s278 + $0x178] sm:$0xff] %v2067
        %2324 = vst [vmem:[%s278 + $0x180] sm:$0xff] %v2068
        %2325 = vst [vmem:[%s278 + $0x188] sm:$0xff] %v2069
        %2326 = vst [vmem:[%s278 + $0x190] sm:$0xff] %v2070
        %2327 = vst [vmem:[%s278 + $0x198] sm:$0xff] %v2071
        %2328 = vst [vmem:[%s278 + $0x1a0] sm:$0xff] %v2072
        %2329 = vst [vmem:[%s278 + $0x1a8] sm:$0xff] %v2073
        %2330 = vst [vmem:[%s278 + $0x1b0] sm:$0xff] %v2074
        %2331 = vst [vmem:[%s278 + $0x1b8] sm:$0xff] %v2075
        %2332 = vst [vmem:[%s278 + $0x1c0] sm:$0xff] %v2076
        %2333 = vst [vmem:[%s278 + $0x1c8] sm:$0xff] %v2077
        %2334 = vst [vmem:[%s278 + $0x1d0] sm:$0xff] %v2078
        %2335 = vst [vmem:[%s278 + $0x1d8] sm:$0xff] %v2079
        %2336 = vst [vmem:[%s278 + $0x1e0] sm:$0xff] %v2080
        %2337 = vst [vmem:[%s278 + $0x1e8] sm:$0xff] %v2081
        %2338 = vst [vmem:[%s278 + $0x1f0] sm:$0xff] %v2082
        %2339 = vst [vmem:[%s278 + $0x1f8] sm:$0xff] %v2083
        %2340 = vst [vmem:[%s278 + $0x200] sm:$0xff] %v2084
        %2341 = vst [vmem:[%s278 + $0x208] sm:$0xff] %v2085
        %2342 = vst [vmem:[%s278 + $0x210] sm:$0xff] %v2086
        %2343 = vst [vmem:[%s278 + $0x218] sm:$0xff] %v2087
        %2344 = vst [vmem:[%s278 + $0x220] sm:$0xff] %v2088
        %2345 = vst [vmem:[%s278 + $0x228] sm:$0xff] %v2089
        %2346 = vst [vmem:[%s278 + $0x230] sm:$0xff] %v2090
        %2347 = vst [vmem:[%s278 + $0x238] sm:$0xff] %v2091
        %2348 = vst [vmem:[%s278 + $0x240] sm:$0xff] %v2092
        %2349 = vst [vmem:[%s278 + $0x248] sm:$0xff] %v2093
        %2350 = vst [vmem:[%s278 + $0x250] sm:$0xff] %v2094
        %2351 = vst [vmem:[%s278 + $0x258] sm:$0xff] %v2095
        %2352 = vst [vmem:[%s278 + $0x260] sm:$0xff] %v2096
        %2353 = vst [vmem:[%s278 + $0x268] sm:$0xff] %v2097
        %2354 = vst [vmem:[%s278 + $0x270] sm:$0xff] %v2098
        %2355 = vst [vmem:[%s278 + $0x278] sm:$0xff] %v2099
        %2356 = vst [vmem:[%s278 + $0x280] sm:$0xff] %v2100
        %2357 = vst [vmem:[%s278 + $0x288] sm:$0xff] %v2101
        %2358 = vst [vmem:[%s278 + $0x290] sm:$0xff] %v2102
        %2359 = vst [vmem:[%s278 + $0x298] sm:$0xff] %v2103
        %2360 = vst [vmem:[%s278 + $0x2a0] sm:$0xff] %v2104
        %2361 = vst [vmem:[%s278 + $0x2a8] sm:$0xff] %v2105
        %2362 = vst [vmem:[%s278 + $0x2b0] sm:$0xff] %v2106
        %2363 = vst [vmem:[%s278 + $0x2b8] sm:$0xff] %v2107
        %2364 = vst [vmem:[%s278 + $0x2c0] sm:$0xff] %v2108
        %2365 = vst [vmem:[%s278 + $0x2c8] sm:$0xff] %v2109
        %2366 = vst [vmem:[%s278 + $0x2d0] sm:$0xff] %v2110
        %2367 = vst [vmem:[%s278 + $0x2d8] sm:$0xff] %v2111
        %2368 = vst [vmem:[%s278 + $0x2e0] sm:$0xff] %v2112
        %2369 = vst [vmem:[%s278 + $0x2e8] sm:$0xff] %v2113
        %2370 = vst [vmem:[%s278 + $0x2f0] sm:$0xff] %v2114
        %2371 = vst [vmem:[%s278 + $0x2f8] sm:$0xff] %v2115
        %2372 = vst [vmem:[%s278 + $0x300] sm:$0xff] %v2116
        %2373 = vst [vmem:[%s278 + $0x308] sm:$0xff] %v2117
        %2374 = vst [vmem:[%s278 + $0x310] sm:$0xff] %v2118
        %2375 = vst [vmem:[%s278 + $0x318] sm:$0xff] %v2119
        %2376 = vst [vmem:[%s278 + $0x320] sm:$0xff] %v2120
        %2377 = vst [vmem:[%s278 + $0x328] sm:$0xff] %v2121
        %2378 = vst [vmem:[%s278 + $0x330] sm:$0xff] %v2122
        %2379 = vst [vmem:[%s278 + $0x338] sm:$0xff] %v2123
        %2380 = vst [vmem:[%s278 + $0x340] sm:$0xff] %v2124
        %2381 = vst [vmem:[%s278 + $0x348] sm:$0xff] %v2125
        %2382 = vst [vmem:[%s278 + $0x350] sm:$0xff] %v2126
        %2383 = vst [vmem:[%s278 + $0x358] sm:$0xff] %v2127
        %2384 = vst [vmem:[%s278 + $0x360] sm:$0xff] %v2128
        %2385 = vst [vmem:[%s278 + $0x368] sm:$0xff] %v2129
        %2386 = vst [vmem:[%s278 + $0x370] sm:$0xff] %v2130
        %2387 = vst [vmem:[%s278 + $0x378] sm:$0xff] %v2131
        %2388 = vst [vmem:[%s278 + $0x380] sm:$0xff] %v2132
        %2389 = vst [vmem:[%s278 + $0x388] sm:$0xff] %v2133
        %2390 = vst [vmem:[%s278 + $0x390] sm:$0xff] %v2134
        %2391 = vst [vmem:[%s278 + $0x398] sm:$0xff] %v2135
        %2392 = vst [vmem:[%s278 + $0x3a0] sm:$0xff] %v2136
        %2393 = vst [vmem:[%s278 + $0x3a8] sm:$0xff] %v2137
        %2394 = vst [vmem:[%s278 + $0x3b0] sm:$0xff] %v2138
        %2395 = vst [vmem:[%s278 + $0x3b8] sm:$0xff] %v2139
        %2396 = vst [vmem:[%s278 + $0x3c0] sm:$0xff] %v2140
        %2397 = vst [vmem:[%s278 + $0x3c8] sm:$0xff] %v2141
        %2398 = vst [vmem:[%s278 + $0x3d0] sm:$0xff] %v2142
        %2399 = vst [vmem:[%s278 + $0x3d8] sm:$0xff] %v2143
        %2400 = vst [vmem:[%s278 + $0x3e0] sm:$0xff] %v2144
        %2401 = vst [vmem:[%s278 + $0x3e8] sm:$0xff] %v2145
        %2402 = vst [vmem:[%s278 + $0x3f0] sm:$0xff] %v2146
        %2403 = vst [vmem:[%s278 + $0x3f8] sm:$0xff] %v2147
        %2404 = vst [vmem:[%s278 + $0x400] sm:$0xff] %v2148
        %2405 = vst [vmem:[%s278 + $0x408] sm:$0xff] %v2149
        %2406 = vst [vmem:[%s278 + $0x410] sm:$0xff] %v2150
        %2407 = vst [vmem:[%s278 + $0x418] sm:$0xff] %v2151
        %2408 = vst [vmem:[%s278 + $0x420] sm:$0xff] %v2152
        %2409 = vst [vmem:[%s278 + $0x428] sm:$0xff] %v2153
        %2410 = vst [vmem:[%s278 + $0x430] sm:$0xff] %v2154
        %2411 = vst [vmem:[%s278 + $0x438] sm:$0xff] %v2155
        %2412 = vst [vmem:[%s278 + $0x440] sm:$0xff] %v2156
        %2413 = vst [vmem:[%s278 + $0x448] sm:$0xff] %v2157
        %2414 = vst [vmem:[%s278 + $0x450] sm:$0xff] %v2158
        %2415 = vst [vmem:[%s278 + $0x458] sm:$0xff] %v2159
        %2416 = vst [vmem:[%s278 + $0x460] sm:$0xff] %v2160
        %2417 = vst [vmem:[%s278 + $0x468] sm:$0xff] %v2161
        %2418 = vst [vmem:[%s278 + $0x470] sm:$0xff] %v2162
        %2419 = vst [vmem:[%s278 + $0x478] sm:$0xff] %v2163
        %2420 = vst [vmem:[%s278 + $0x480] sm:$0xff] %v2164
        %2421 = vst [vmem:[%s278 + $0x488] sm:$0xff] %v2165
        %2422 = vst [vmem:[%s278 + $0x490] sm:$0xff] %v2166
        %2423 = vst [vmem:[%s278 + $0x498] sm:$0xff] %v2167
        %2424 = vst [vmem:[%s278 + $0x4a0] sm:$0xff] %v2168
        %2425 = vst [vmem:[%s278 + $0x4a8] sm:$0xff] %v2169
        %2426 = vst [vmem:[%s278 + $0x4b0] sm:$0xff] %v2170
        %2427 = vst [vmem:[%s278 + $0x4b8] sm:$0xff] %v2171
        %2428 = vst [vmem:[%s278 + $0x4c0] sm:$0xff] %v2172
        %2429 = vst [vmem:[%s278 + $0x4c8] sm:$0xff] %v2173
        %2430 = vst [vmem:[%s278 + $0x4d0] sm:$0xff] %v2174
        %2431 = vst [vmem:[%s278 + $0x4d8] sm:$0xff] %v2175
        %2432 = vst [vmem:[%s278 + $0x4e0] sm:$0xff] %v2176
        %2433 = vst [vmem:[%s278 + $0x4e8] sm:$0xff] %v2177
        %2434 = vst [vmem:[%s278 + $0x4f0] sm:$0xff] %v2178
        %2435 = vst [vmem:[%s278 + $0x4f8] sm:$0xff] %v2179
        %2436 = vst [vmem:[%s278 + $0x500] sm:$0xff] %v2180
        %2437 = vst [vmem:[%s278 + $0x508] sm:$0xff] %v2181
        %2438 = vst [vmem:[%s278 + $0x510] sm:$0xff] %v2182
        %2439 = vst [vmem:[%s278 + $0x518] sm:$0xff] %v2183
        %2440 = vst [vmem:[%s278 + $0x520] sm:$0xff] %v2184
        %2441 = vst [vmem:[%s278 + $0x528] sm:$0xff] %v2185
        %2442 = vst [vmem:[%s278 + $0x530] sm:$0xff] %v2186
        %2443 = vst [vmem:[%s278 + $0x538] sm:$0xff] %v2187
        %2444 = vst [vmem:[%s278 + $0x540] sm:$0xff] %v2188
        %2445 = vst [vmem:[%s278 + $0x548] sm:$0xff] %v2189
        %2446 = vst [vmem:[%s278 + $0x550] sm:$0xff] %v2190
        %2447 = vst [vmem:[%s278 + $0x558] sm:$0xff] %v2191
        %2448 = vst [vmem:[%s278 + $0x560] sm:$0xff] %v2192
        %2449 = vst [vmem:[%s278 + $0x568] sm:$0xff] %v2193
        %2450 = vst [vmem:[%s278 + $0x570] sm:$0xff] %v2194
        %2451 = vst [vmem:[%s278 + $0x578] sm:$0xff] %v2195
        %2452 = vst [vmem:[%s278 + $0x580] sm:$0xff] %v2196
        %2453 = vst [vmem:[%s278 + $0x588] sm:$0xff] %v2197
        %2454 = vst [vmem:[%s278 + $0x590] sm:$0xff] %v2198
        %2455 = vst [vmem:[%s278 + $0x598] sm:$0xff] %v2199
        %2456 = vst [vmem:[%s278 + $0x5a0] sm:$0xff] %v2200
        %2457 = vst [vmem:[%s278 + $0x5a8] sm:$0xff] %v2201
        %2458 = vst [vmem:[%s278 + $0x5b0] sm:$0xff] %v2202
        %2459 = vst [vmem:[%s278 + $0x5b8] sm:$0xff] %v2203
        %2460 = vst [vmem:[%s278 + $0x5c0] sm:$0xff] %v2204
        %2461 = vst [vmem:[%s278 + $0x5c8] sm:$0xff] %v2205
        %2462 = vst [vmem:[%s278 + $0x5d0] sm:$0xff] %v2206
        %2463 = vst [vmem:[%s278 + $0x5d8] sm:$0xff] %v2207
        %2464 = vst [vmem:[%s278 + $0x5e0] sm:$0xff] %v2208
        %2465 = vst [vmem:[%s278 + $0x5e8] sm:$0xff] %v2209
        %2466 = vst [vmem:[%s278 + $0x5f0] sm:$0xff] %v2210
        %2467 = vst [vmem:[%s278 + $0x5f8] sm:$0xff] %v2211
        %2468 = vst [vmem:[%s278 + $0x600] sm:$0xff] %v2212
        %2469 = vst [vmem:[%s278 + $0x608] sm:$0xff] %v2213
        %2470 = vst [vmem:[%s278 + $0x610] sm:$0xff] %v2214
        %2471 = vst [vmem:[%s278 + $0x618] sm:$0xff] %v2215
        %2472 = vst [vmem:[%s278 + $0x620] sm:$0xff] %v2216
        %2473 = vst [vmem:[%s278 + $0x628] sm:$0xff] %v2217
        %2474 = vst [vmem:[%s278 + $0x630] sm:$0xff] %v2218
        %2475 = vst [vmem:[%s278 + $0x638] sm:$0xff] %v2219
        %2476 = vst [vmem:[%s278 + $0x640] sm:$0xff] %v2220
        %2477 = vst [vmem:[%s278 + $0x648] sm:$0xff] %v2221
        %2478 = vst [vmem:[%s278 + $0x650] sm:$0xff] %v2222
        %2479 = vst [vmem:[%s278 + $0x658] sm:$0xff] %v2223
        %2480 = vst [vmem:[%s278 + $0x660] sm:$0xff] %v2224
        %2481 = vst [vmem:[%s278 + $0x668] sm:$0xff] %v2225
        %2482 = vst [vmem:[%s278 + $0x670] sm:$0xff] %v2226
        %2483 = vst [vmem:[%s278 + $0x678] sm:$0xff] %v2227
        %2484 = vst [vmem:[%s278 + $0x680] sm:$0xff] %v2228
        %2485 = vst [vmem:[%s278 + $0x688] sm:$0xff] %v2229
        %2486 = vst [vmem:[%s278 + $0x690] sm:$0xff] %v2230
        %2487 = vst [vmem:[%s278 + $0x698] sm:$0xff] %v2231
        %2488 = vst [vmem:[%s278 + $0x6a0] sm:$0xff] %v2232
        %2489 = vst [vmem:[%s278 + $0x6a8] sm:$0xff] %v2233
        %2490 = vst [vmem:[%s278 + $0x6b0] sm:$0xff] %v2234
        %2491 = vst [vmem:[%s278 + $0x6b8] sm:$0xff] %v2235
        %2492 = vst [vmem:[%s278 + $0x6c0] sm:$0xff] %v2236
        %2493 = vst [vmem:[%s278 + $0x6c8] sm:$0xff] %v2237
        %2494 = vst [vmem:[%s278 + $0x6d0] sm:$0xff] %v2238
        %2495 = vst [vmem:[%s278 + $0x6d8] sm:$0xff] %v2239
        %2496 = vst [vmem:[%s278 + $0x6e0] sm:$0xff] %v2240
        %2497 = vst [vmem:[%s278 + $0x6e8] sm:$0xff] %v2241
        %2498 = vst [vmem:[%s278 + $0x6f0] sm:$0xff] %v2242
        %2499 = vst [vmem:[%s278 + $0x6f8] sm:$0xff] %v2243
        %2500 = vst [vmem:[%s278 + $0x700] sm:$0xff] %v2244
        %2501 = vst [vmem:[%s278 + $0x708] sm:$0xff] %v2245
        %2502 = vst [vmem:[%s278 + $0x710] sm:$0xff] %v2246
        %2503 = vst [vmem:[%s278 + $0x718] sm:$0xff] %v2247
        %2504 = vst [vmem:[%s278 + $0x720] sm:$0xff] %v2248
        %2505 = vst [vmem:[%s278 + $0x728] sm:$0xff] %v2249
        %2506 = vst [vmem:[%s278 + $0x730] sm:$0xff] %v2250
        %2507 = vst [vmem:[%s278 + $0x738] sm:$0xff] %v2251
        %2508 = vst [vmem:[%s278 + $0x740] sm:$0xff] %v2252
        %2509 = vst [vmem:[%s278 + $0x748] sm:$0xff] %v2253
        %2510 = vst [vmem:[%s278 + $0x750] sm:$0xff] %v2254
        %2511 = vst [vmem:[%s278 + $0x758] sm:$0xff] %v2255
        %2512 = vst [vmem:[%s278 + $0x760] sm:$0xff] %v2256
        %2513 = vst [vmem:[%s278 + $0x768] sm:$0xff] %v2257
        %2514 = vst [vmem:[%s278 + $0x770] sm:$0xff] %v2258
        %2515 = vst [vmem:[%s278 + $0x778] sm:$0xff] %v2259
        %2516 = vst [vmem:[%s278 + $0x780] sm:$0xff] %v2260
        %2517 = vst [vmem:[%s278 + $0x788] sm:$0xff] %v2261
        %2518 = vst [vmem:[%s278 + $0x790] sm:$0xff] %v2262
        %2519 = vst [vmem:[%s278 + $0x798] sm:$0xff] %v2263
        %2520 = vst [vmem:[%s278 + $0x7a0] sm:$0xff] %v2264
        %2521 = vst [vmem:[%s278 + $0x7a8] sm:$0xff] %v2265
        %2522 = vst [vmem:[%s278 + $0x7b0] sm:$0xff] %v2266
        %2523 = vst [vmem:[%s278 + $0x7b8] sm:$0xff] %v2267
        %2524 = vst [vmem:[%s278 + $0x7c0] sm:$0xff] %v2268
        %2525 = vst [vmem:[%s278 + $0x7c8] sm:$0xff] %v2269
        %2526 = vst [vmem:[%s278 + $0x7d0] sm:$0xff] %v2270
        %2527 = vst [vmem:[%s278 + $0x7d8] sm:$0xff] %v2271
        %2528 = vst [vmem:[%s278 + $0x7e0] sm:$0xff] %v2272
        %2529 = vst [vmem:[%s278 + $0x7e8] sm:$0xff] %v2273
        %2530 = vst [vmem:[%s278 + $0x7f0] sm:$0xff] %v2274
        %2531 = vst [vmem:[%s278 + $0x7f8] sm:$0xff] %v2275
        %s2532 = sand.u32 %s127, 1
        %s2533 = scalar_lea.sflag [#allocation4], %s2532
        %s2534 = sand.u32 %s127, 1
        %s2535 = smul.addr %s2534, 2048
        %s2536 = scalar_lea.vmem [#allocation7], %s2535
        // Predicated region
        $region41: #{tpu_custom_call.1} parent=31 // pred_check
          %p2537 = pneg %p137
        $region42: #{tpu_custom_call.1} parent=31 // pred_check_branch
          %2539 = sbr.rel (%p2537) target = $region44
        $region43: #{tpu_custom_call.1} parent=31 // pred_region
          %s2540 = smul.u32 4, %s27
          %s2541 = smul.u32 32, %s28
          %s2543 = ssub.s32 32768, 32768
          %2544 = vsyncadd %s2533, %s2543
          %s2545 = smul.addr %s2541, 2
          %s2546 = smul.addr %s2540, 64
          %s2547 = sadd.s32 %s2545, %s2546
          %s2548 = smul.addr %s2547, 128
          %s2549 = scalar_lea.hbm %s3, %s2548
          %s2550 = sshll.u32 %s2536, 4
          %s2551 = int_to_ptr.vmem [resolvable:$true] %s2550
          %2556 = dma.vmem_to_hbm [thread:$0]  %s2551, 32768, %s2549, %s2533, 256, 256, 16
        $region44: #{tpu_custom_call.1} parent=31 // pred_fallthru
          _
      $region32: #{tpu_custom_call.1} parent=5 // pred_fallthru
        _
      %p2557 = scmp.le.s32.totalorder 2, %s18
      // Predicated region
      $region45: #{tpu_custom_call.1} parent=5 // pred_check
        %p2558 = pneg %p2557
      $region46: #{tpu_custom_call.1} parent=5 // pred_check_branch
        %2560 = sbr.rel (%p2558) target = $region48
      $region47: #{tpu_custom_call.1} parent=5 // pred_region
        %s2561 = ssub.s32 %s18, 2
        // Predicated region
        $region49: #{tpu_custom_call.1} parent=47 // pred_check
          %p2562 = pneg %p143
        $region50: #{tpu_custom_call.1} parent=47 // pred_check_branch
          %2564 = sbr.rel (%p2562) target = $region52
        $region51: #{tpu_custom_call.1} parent=47 // pred_region
          %s2565 = sand.u32 %s128, 1
          %s2566 = scalar_lea.sflag [#allocation4], %s2565
          %s2567 = sand.u32 %s128, 1
          %s2568 = smul.addr %s2567, 2048
          %s2569 = scalar_lea.vmem [#allocation7], %s2568
          %2570 = dma.done %s2566, 32768
        $region52: #{tpu_custom_call.1} parent=47 // pred_fallthru
          _
      $region48: #{tpu_custom_call.1} parent=5 // pred_fallthru
        _
    $region6: #{tpu_custom_call.1} parent=1 // loop_footer
      %s22 = sadd.s32 1, %s18
    $region7: #{tpu_custom_call.1} parent=1 // loop_footer_branch
      %17 = sbr.rel target = $region3
    $region8: #{tpu_custom_call.1} parent=1 // loop_exit
      _
    %2571 = vsyncpa [#allocation3], 1
    %s2572 = scalar_lea.sflag [#allocation3], 1
    %2573 = vsyncpa %s2572, 1
    %2574 = vsyncpa [#allocation6], 1
    %s2575 = scalar_lea.sflag [#allocation6], 1
    %2576 = vsyncpa %s2575, 1
    %2577 = vsyncpa [#allocation4], 1
    %s2578 = scalar_lea.sflag [#allocation4], 1
    %2579 = vsyncpa %s2578, 1

</llo_original>
